<compile_context>
chip_gen: v6e
topology: v6e:2x2x1
jax: 0.10.0
libtpu: 0.0.40
codegen_flags: <defaults>
</compile_context>

<pallas_src>
import functools

import jax
import jax.numpy as jnp
from jax.experimental import pallas as pl
from jax.experimental.pallas import tpu as pltpu


# ----------------------------------------------------------------------------
# Per-generation VMEM budget (v5e/v6e: 128 MiB physical, v7x: 64 MiB).
# ----------------------------------------------------------------------------
def _vmem_budget_bytes() -> int:
    try:
        cap = int(pltpu.get_tpu_info().vmem_capacity_bytes)
    except Exception:
        cap = 64 << 20                      # conservative (v7x-sized) fallback
    return max(32 << 20, min(cap // 2, 64 << 20))


@functools.lru_cache(maxsize=None)
def _bilinear_matrix(out_size: int, in_size: int) -> jnp.ndarray:
    """(out_size, in_size) row-stochastic bilinear interpolation matrix
    (align_corners=False, no antialias) — matches PyTorch's bilinear resize."""
    scale = in_size / out_size
    o = jnp.arange(out_size, dtype=jnp.float32)
    src = jnp.clip((o + 0.5) * scale - 0.5, 0.0, float(in_size - 1))
    lo = jnp.floor(src).astype(jnp.int32)
    hi = jnp.minimum(lo + 1, in_size - 1)
    frac = src - lo.astype(jnp.float32)
    rows = jnp.arange(out_size)
    m = jnp.zeros((out_size, in_size), dtype=jnp.float32)
    m = m.at[rows, lo].add(1.0 - frac)
    m = m.at[rows, hi].add(frac)
    return m


# kron(A, B)^T cache: built directly in transposed layout (no extra HBM
# transpose pass) and reused across calls — it is effectively a constant.
_KRON_T_CACHE: dict = {}


def _kron_t(shape: int, h: int, w: int, dtype) -> jnp.ndarray:
    key = (shape, h, w, jnp.dtype(dtype).name)
    kt = _KRON_T_CACHE.get(key)
    if kt is None:
        a = _bilinear_matrix(shape, h)            # (S, H)
        b = _bilinear_matrix(shape, w)            # (S, W)
        # kt[h*W + w, s*S + t] = a[s, h] * b[t, w]  ==  kron(a, b).T
        kt = jnp.einsum("sh,tw->hwst", a, b).reshape(h * w, shape * shape)
        kt = kt.astype(dtype)
        _KRON_T_CACHE[key] = kt
    return kt


# ----------------------------------------------------------------------------
# Kernel 1: fused resize + flatten via kron(A, B)^T, column-block streamed.
# ----------------------------------------------------------------------------
def _kron_resize_kernel(kt_ref, x_ref, o_ref):
    # kt_ref: (H*W, CB)   column block of kron(A, B)^T (streamed along grid j)
    # x_ref:  (Bnc, H*W)  block of flattened input planes (same block over j)
    # o_ref:  (Bnc, CB)   lane-dense flattened output block
    o_ref[...] = jnp.dot(
        x_ref[...], kt_ref[...], preferred_element_type=jnp.float32
    ).astype(o_ref.dtype)


# ----------------------------------------------------------------------------
# Kernel 2: factored A @ X @ B^T on a block of planes — generic shape path.
# ----------------------------------------------------------------------------
def _resize_block_kernel(a_ref, bt_ref, x_ref, o_ref, tmp_ref):
    # a_ref:   (S, H)      row-interp matrix (grid-invariant)
    # bt_ref:  (W, S)      column-interp matrix, transposed (grid-invariant)
    # x_ref:   (B, H, W)   block of input planes
    # o_ref:   (B, S, S)   block of resized planes
    # tmp_ref: (B, H, S)   VMEM scratch for the column-resize intermediate
    nb, h, w = x_ref.shape
    s = a_ref.shape[0]
    # Column resize with the plane block folded into the MXU M dimension.
    tmp_ref[...] = jnp.dot(
        x_ref[...].reshape(nb * h, w), bt_ref[...],
        preferred_element_type=jnp.float32,
    ).reshape(nb, h, s).astype(tmp_ref.dtype)
    # Row resize per plane; reading the intermediate back from the scratch ref
    # keeps only one (H, S) slice live per unrolled iteration.
    a = a_ref[...]
    for b in range(nb):
        o_ref[b] = jnp.dot(
            a, tmp_ref[b], preferred_element_type=jnp.float32
        ).astype(o_ref.dtype)


# ----------------------------------------------------------------------------
# Block-size pickers.
# ----------------------------------------------------------------------------
def _pick_col_split(total_cols: int, rows: int, esize: int,
                    target_bytes: int = 2 << 20) -> int:
    """Number of column blocks for the kron operator: keep each (rows, CB)
    block <= target_bytes, CB a multiple of 128, and >= 2 blocks when possible
    (keeps both v7x TensorCores busy even when the plane-block grid is 1)."""
    n = 1
    while True:
        cand = n * 2
        if total_cols % cand:
            break
        cb = total_cols // cand
        if cb % 128:
            break
        if rows * (total_cols // n) * esize <= target_bytes and n >= 2:
            break
        n = cand
    return n


def _pick_plane_block(nc: int, h: int, w: int, s: int, esize: int,
                      budget: int) -> int:
    """Largest divisor of nc whose per-step buffers (double-buffered x and out
    blocks + column-resize scratch) fit comfortably in the VMEM budget."""
    per_plane = 2 * h * w * esize + 2 * s * s * esize + h * s * esize
    cap = max(1, min(32, (budget // 3) // max(per_plane, 1)))
    if nc >= 2:
        cap = min(cap, max(1, nc // 2))     # keep grid length >= 2 (megacore)
    cap = min(cap, nc)
    for b in range(cap, 0, -1):
        if nc % b == 0:
            return b
    return 1


# ----------------------------------------------------------------------------
# Wrapper: Reshape(shape).forward(x) for NCHW float input.
# ----------------------------------------------------------------------------
def reshape_forward(x: jnp.ndarray, shape: int = 224) -> jnp.ndarray:
    n, c, h, w = x.shape
    nc = n * c
    esize = jnp.dtype(x.dtype).itemsize
    budget = _vmem_budget_bytes()

    # Fused kron path whenever the operator is small (covers shape=32/64 on
    # small planes); column blocks are streamed so VMEM stays bounded on all
    # generations.  Note: the grid-invariant x block is intentionally left
    # double-buffered (pl.Buffered(1) single-buffering is a further option).
    kron_bytes = h * w * shape * shape * esize
    use_kron = kron_bytes <= (6 << 20)

    if use_kron:
        kt = _kron_t(shape, h, w, x.dtype)        # (H*W, S*S), MXU-native dtype
        x_flat = x.reshape(nc, h * w)             # (NC, H*W)
        row_cap = 256 if budget >= (64 << 20) else 128
        bnc = nc if nc <= row_cap else row_cap
        n_col = _pick_col_split(shape * shape, h * w, esize)
        cb = (shape * shape) // n_col
        out_flat = pl.pallas_call(
            _kron_resize_kernel,
            out_shape=jax.ShapeDtypeStruct((nc, shape * shape), x.dtype),
            grid_spec=pltpu.PrefetchScalarGridSpec(
                num_scalar_prefetch=0,
                grid=(pl.cdiv(nc, bnc), n_col),
                in_specs=[
                    pl.BlockSpec((h * w, cb), lambda i, j: (0, j)),
                    pl.BlockSpec((bnc, h * w), lambda i, j: (i, 0)),
                ],
                out_specs=pl.BlockSpec((bnc, cb), lambda i, j: (i, j)),
            ),
            compiler_params=pltpu.CompilerParams(
                dimension_semantics=("parallel", "parallel"),
                vmem_limit_bytes=budget),
        )(kt, x_flat)
        if shape == 64:
            # (NC, S*S) -> (N, C*S*S): contiguous, == torch.reshape(bs, -1).
            return out_flat.reshape(n, c * shape * shape)
        return out_flat.reshape(n, c, shape, shape)

    # Generic factored path (large operator, e.g. shape=224).
    a = _bilinear_matrix(shape, h).astype(x.dtype)       # (S, H)
    bt = _bilinear_matrix(shape, w).T.astype(x.dtype)    # (W, S)
    x_planes = x.reshape(nc, h, w)
    bp = _pick_plane_block(nc, h, w, shape, esize, budget)
    out = pl.pallas_call(
        _resize_block_kernel,
        out_shape=jax.ShapeDtypeStruct((nc, shape, shape), x.dtype),
        grid_spec=pltpu.PrefetchScalarGridSpec(
            num_scalar_prefetch=0,
            grid=(nc // bp,),
            in_specs=[
                pl.BlockSpec((shape, h), lambda i: (0, 0)),     # A, resident
                pl.BlockSpec((w, shape), lambda i: (0, 0)),     # B^T, resident
                pl.BlockSpec((bp, h, w), lambda i: (i, 0, 0)),  # plane block
            ],
            out_specs=pl.BlockSpec((bp, shape, shape), lambda i: (i, 0, 0)),
            scratch_shapes=[pltpu.VMEM((bp, h, shape), x.dtype)],
        ),
        compiler_params=pltpu.CompilerParams(
            dimension_semantics=("parallel",),
            vmem_limit_bytes=budget),
    )(a, bt, x_planes)

    out = out.reshape(n, c, shape, shape)
    if shape == 64:
        out = out.reshape(n, -1)
    return out


if __name__ == "__main__":
    key = jax.random.PRNGKey(0)
    x = jax.random.normal(key, (2, 4, 16, 16), dtype=jnp.float32)
    xp = x.reshape(-1, 16, 16).astype(jnp.float32)

    def ref_resize(planes, s):
        a = _bilinear_matrix(s, 16)
        b = _bilinear_matrix(s, 16)
        return jnp.einsum("sh,phw,tw->pst", a, planes, b,
                          precision=jax.lax.Precision.HIGHEST)

    # shape == 64: fused kron path, flattened output.
    y = jax.block_until_ready(reshape_forward(x, shape=64))
    assert y.shape == (2, 4 * 64 * 64), y.shape
    ref = ref_resize(xp, 64).reshape(2, -1).astype(x.dtype)
    assert jnp.allclose(y, ref, atol=5e-4), float(jnp.abs(y - ref).max())

    # shape == 32: small downsample, also served by the fused kron path now.
    y2 = jax.block_until_ready(reshape_forward(x, shape=32))
    assert y2.shape == (2, 4, 32, 32), y2.shape
    ref2 = ref_resize(xp, 32).reshape(2, 4, 32, 32).astype(x.dtype)
    assert jnp.allclose(y2, ref2, atol=5e-4), float(jnp.abs(y2 - ref2).max())

    # shape == 224 (module default): generic factored path.
    y3 = jax.block_until_ready(reshape_forward(x, shape=224))
    assert y3.shape == (2, 4, 224, 224), y3.shape
    ref3 = ref_resize(xp, 224).reshape(2, 4, 224, 224).astype(x.dtype)
    assert jnp.allclose(y3, ref3, atol=5e-4), float(jnp.abs(y3 - ref3).max())

    print("KERNEL_OK")
</pallas_src>

<mosaic_0001>
module attributes {stable_mosaic.version = 11 : i64} {
  func.func @_kron_resize_kernel(%arg0: i32, %arg1: i32, %arg2: memref<256x2048xf32, #tpu.memory_space<vmem>>, %arg3: memref<8x256xf32, #tpu.memory_space<vmem>>, %arg4: memref<8x2048xf32, #tpu.memory_space<vmem>>) attributes {dimension_semantics = [#tpu.dimension_semantics<parallel>, #tpu.dimension_semantics<parallel>], iteration_bounds = array<i64: 1, 2>, scalar_prefetch = 0 : i64, scratch_operands = 0 : i64, tpu.core_type = #tpu.core_type<tc>, window_params = [{transform_indices = @transform_0, window_bounds = array<i64: 256, 2048>}, {transform_indices = @transform_1, window_bounds = array<i64: 8, 256>}, {transform_indices = @transform_2, window_bounds = array<i64: 8, 2048>}]} {
    %c0 = arith.constant 0 : index
    %c0_0 = arith.constant 0 : index
    %0 = vector.load %arg3[%c0, %c0_0] : memref<8x256xf32, #tpu.memory_space<vmem>>, vector<8x256xf32>
    %c0_1 = arith.constant 0 : index
    %c0_2 = arith.constant 0 : index
    %1 = vector.load %arg2[%c0_1, %c0_2] : memref<256x2048xf32, #tpu.memory_space<vmem>>, vector<256x2048xf32>
    %cst = arith.constant dense<0.000000e+00> : vector<8x2048xf32>
    %2 = tpu.matmul %0, %1, %cst {dimension_numbers = #tpu.dot_dimension_numbers<[1], [0], [0], [1], [0, 0, 1, 1], [], []>} : vector<8x256xf32>, vector<256x2048xf32>, vector<8x2048xf32> -> vector<8x2048xf32>
    %c0_3 = arith.constant 0 : index
    %c0_4 = arith.constant 0 : index
    %3 = vector.load %arg4[%c0_3, %c0_4] : memref<8x2048xf32, #tpu.memory_space<vmem>>, vector<8x2048xf32>
    tpu.vector_store %arg4[%c0_3, %c0_4], %2 {strides = array<i32>} : memref<8x2048xf32, #tpu.memory_space<vmem>>, vector<8x2048xf32>,
    return
  }
  func.func @transform_0(%arg0: i32, %arg1: i32) -> (i32, i32) {
    %c0_i32 = arith.constant 0 : i32
    %c0_i32_0 = arith.constant 0 : i32
    return %c0_i32, %arg1 : i32, i32
  }
  func.func @transform_1(%arg0: i32, %arg1: i32) -> (i32, i32) {
    %c0_i32 = arith.constant 0 : i32
    %c0_i32_0 = arith.constant 0 : i32
    return %arg0, %c0_i32 : i32, i32
  }
  func.func @transform_2(%arg0: i32, %arg1: i32) -> (i32, i32) {
    %c0_i32 = arith.constant 0 : i32
    return %arg0, %arg1 : i32, i32
  }
}

</mosaic_0001>

<llo_original>
// kernel: tpu_custom_call.1
$region0: #{tpu_custom_call.1}
  #allocation0 [shape = 'u32[]', space=smem, size = 0x4, offset = 0x4, fixed_abs, tag = 'smem constant byte address 0x4 - core index']
  #allocation1 [shape = 'u32[144,128]{1,0:T(1,128)}', space=vmem, size = 0x12000, scoped, tag = 'internal scratch']
  %s0 = inlined_call_operand.hbm [shape: f32[256,4096], index: 0, kind: input, shape index: {}]
  %s1 = inlined_call_operand.hbm [shape: f32[8,256], index: 1, kind: input, shape index: {}]
  %s2 = inlined_call_operand.hbm [shape: f32[8,4096], index: 2, kind: output, shape index: {}]
  %s3 = sld [smem:[#allocation0]]
  $region49: #{tpu_custom_call.1} parent=0
    _
  %s5 = ssub.s32 1, %s3
  %s6 = scalar_select 0, %s5, %s3
  $region1: #{tpu_custom_call.1} parent=0
    #allocation2 [shape = 'u8[4194304]{0}', space=vmem, size = 0x400000, scoped, tag = 'input window, operand 0']
    #allocation3 [shape = 's32[2]{0}', space=sflag, size = 0x8, scoped, tag = 'scoped memory for tpu_custom_call.1']
    #allocation4 [shape = 's32[2]{0}', space=sflag, size = 0x8, scoped, tag = 'scoped memory for tpu_custom_call.1']
    #allocation5 [shape = 'u8[8192]{0}', space=vmem, size = 0x2000, scoped, tag = 'input window, operand 1, single buffered']
    #allocation6 [shape = 's32[1]{0}', space=sflag, size = 0x4, scoped, tag = 'scoped memory for tpu_custom_call.1']
    #allocation7 [shape = 'u8[131072]{0}', space=vmem, size = 0x20000, scoped, tag = 'output window, operand 0']
    %7 = vsyncpa [#allocation3], 0
    %s8 = scalar_lea.sflag [#allocation3], 1
    %9 = vsyncpa %s8, 0
    %10 = vsyncpa [#allocation6], 0
    %11 = vsyncpa [#allocation4], 0
    %s12 = scalar_lea.sflag [#allocation4], 1
    %13 = vsyncpa %s12, 0
    loop: start=0, step=1, limit=4
    $region2: #{tpu_custom_call.1} parent=1 // loop_pre_header
      _
    $region3: #{tpu_custom_call.1} parent=1 // loop_header
      %s15 = sphi 0, %s19
      %p16 = scmp.ge.s32.totalorder %s15, 4
      %s22 = sphi 0, %s34
      %s23 = sphi 0, %s30
      %s24 = sphi 0, %s22
      %s25 = sphi 0, %s23
      %s26 = sphi 0, %s24
      %s27 = sphi 0, %s25
      %s37 = sphi 0, %s39
      %s40 = sphi 0, %s37
      %s41 = sphi 0, %s40
      %s57 = sphi 0, %s41
      %s63 = sphi 0, %s65
      %s66 = sphi 0, %s63
      %s67 = sphi 0, %s66
      %s83 = sphi 0, %s67
      %s91 = sphi 0, %s93
      %s94 = sphi 0, %s91
      %s95 = sphi 0, %s94
      %s111 = sphi 0, %s95
    $region4: #{tpu_custom_call.1} parent=1 // loop_header_branch
      %18 = sbr.rel (%p16) target = $region8
    $region5: #{tpu_custom_call.1} parent=1 // loop_body
      %s20 = ssub.s32 %s15, 1
      %s21 = ssub.s32 %s15, 2
      %s28 = sadd.s32 1, %s23
      %p29 = scmp.ge.s32.totalorder %s28, 2
      %s30 = scalar_select %p29, 0, %s28
      %s31 = sadd.s32 1, %s22
      %s32 = scalar_select %p29, %s31, %s22
      %p33 = scmp.ge.s32.totalorder %s32, 1
      %s34 = scalar_select %p33, 0, %s32
      %s35 = ssub.s32 %s23, %s30
      %p36 = scmp.eq.s32.totalorder %s35, 0
      %s38 = sadd.s32 %s37, 1
      %s39 = scalar_select %p36, %s37, %s38
      %p42 = pneg %p36
      %p43 = scmp.eq.s32.totalorder %s15, 1
      %p44 = por %p42, %p43
      %p45 = scmp.ne.s32.totalorder %s37, %s40
      %p46 = scmp.eq.s32.totalorder %s15, 0
      %p47 = por %p45, %p46
      %p48 = scmp.ne.s32.totalorder %s37, %s40
      %p49 = scmp.eq.s32.totalorder %s20, 1
      %p50 = por %p48, %p49
      %p51 = scmp.ne.s32.totalorder %s40, %s41
      %p52 = scmp.eq.s32.totalorder %s20, 0
      %p53 = por %p51, %p52
      %p54 = scmp.ne.s32.totalorder %s40, %s41
      %p55 = scmp.eq.s32.totalorder %s21, 1
      %p56 = por %p54, %p55
      %p58 = scmp.ne.s32.totalorder %s41, %s57
      %p59 = scmp.eq.s32.totalorder %s21, 0
      %p60 = por %p58, %p59
      %s61 = ssub.s32 %s22, %s34
      %p62 = scmp.eq.s32.totalorder %s61, 0
      %s64 = sadd.s32 %s63, 1
      %s65 = scalar_select %p62, %s63, %s64
      %p68 = pneg %p62
      %p69 = scmp.eq.s32.totalorder %s15, 1
      %p70 = por %p68, %p69
      %p71 = scmp.ne.s32.totalorder %s63, %s66
      %p72 = scmp.eq.s32.totalorder %s15, 0
      %p73 = por %p71, %p72
      %p74 = scmp.ne.s32.totalorder %s63, %s66
      %p75 = scmp.eq.s32.totalorder %s20, 1
      %p76 = por %p74, %p75
      %p77 = scmp.ne.s32.totalorder %s66, %s67
      %p78 = scmp.eq.s32.totalorder %s20, 0
      %p79 = por %p77, %p78
      %p80 = scmp.ne.s32.totalorder %s66, %s67
      %p81 = scmp.eq.s32.totalorder %s21, 1
      %p82 = por %p80, %p81
      %p84 = scmp.ne.s32.totalorder %s67, %s83
      %p85 = scmp.eq.s32.totalorder %s21, 0
      %p86 = por %p84, %p85
      %s87 = ssub.s32 %s22, %s34
      %s88 = ssub.s32 %s23, %s30
      %s89 = sor.u32 %s87, %s88
      %p90 = scmp.eq.s32.totalorder %s89, 0
      %s92 = sadd.s32 %s91, 1
      %s93 = scalar_select %p90, %s91, %s92
      %p96 = pneg %p90
      %p97 = scmp.eq.s32.totalorder %s15, 1
      %p98 = por %p96, %p97
      %p99 = scmp.ne.s32.totalorder %s91, %s94
      %p100 = scmp.eq.s32.totalorder %s15, 0
      %p101 = por %p99, %p100
      %p102 = scmp.ne.s32.totalorder %s91, %s94
      %p103 = scmp.eq.s32.totalorder %s20, 1
      %p104 = por %p102, %p103
      %p105 = scmp.ne.s32.totalorder %s94, %s95
      %p106 = scmp.eq.s32.totalorder %s20, 0
      %p107 = por %p105, %p106
      %p108 = scmp.ne.s32.totalorder %s94, %s95
      %p109 = scmp.eq.s32.totalorder %s21, 1
      %p110 = por %p108, %p109
      %p112 = scmp.ne.s32.totalorder %s95, %s111
      %p113 = scmp.eq.s32.totalorder %s21, 0
      %p114 = por %p112, %p113
      %p115 = scmp.le.s32.totalorder 1, %s15
      %p116 = scmp.lt.s32.totalorder %s15, 3
      %p117 = pnand %p115, %p116
      %p118 = pneg %p117
      // Predicated region
      $region9: #{tpu_custom_call.1} parent=5 // pred_check
        _
      $region10: #{tpu_custom_call.1} parent=5 // pred_check_branch
        %120 = sbr.rel (%p117) target = $region12
      $region11: #{tpu_custom_call.1} parent=5 // pred_region
        %s121 = ssub.s32 %s15, 1
        // Predicated region
        $region13: #{tpu_custom_call.1} parent=11 // pred_check
          %p122 = pneg %p79
        $region14: #{tpu_custom_call.1} parent=11 // pred_check_branch
          %124 = sbr.rel (%p122) target = $region16
        $region15: #{tpu_custom_call.1} parent=11 // pred_region
          %s126 = ssub.s32 256, 256
          %127 = vsyncadd [#allocation6], %s126
          %s128 = smul.addr %s24, 2
          %s129 = smul.addr %s128, 128
          %s130 = scalar_lea.hbm %s1, %s129
          %s132 = sshll.u32 [#allocation5], 4
          %s133 = int_to_ptr.vmem [resolvable:$true] %s132
          %135 = dma.hbm_to_vmem [thread:$0]  %s130, 256, %s133, [#allocation6]
        $region16: #{tpu_custom_call.1} parent=11 // pred_fallthru
          _
      $region12: #{tpu_custom_call.1} parent=5 // pred_fallthru
        _
      %p136 = scmp.lt.s32.totalorder %s15, 2
      // Predicated region
      $region17: #{tpu_custom_call.1} parent=5 // pred_check
        %p137 = pneg %p136
      $region18: #{tpu_custom_call.1} parent=5 // pred_check_branch
        %139 = sbr.rel (%p137) target = $region20
      $region19: #{tpu_custom_call.1} parent=5 // pred_region
        // Predicated region
        $region21: #{tpu_custom_call.1} parent=19 // pred_check
          %p140 = pneg %p47
        $region22: #{tpu_custom_call.1} parent=19 // pred_check_branch
          %142 = sbr.rel (%p140) target = $region24
        $region23: #{tpu_custom_call.1} parent=19 // pred_region
          %s143 = sand.u32 %s37, 1
          %s144 = scalar_lea.sflag [#allocation3], %s143
          %s145 = sand.u32 %s37, 1
          %s146 = smul.addr %s145, 4096
          %s147 = scalar_lea.vmem [#allocation2], %s146
          %s148 = smul.u32 16, %s23
          %s150 = ssub.s32 65536, 65536
          %151 = vsyncadd %s144, %s150
          %s152 = smul.addr %s148, 128
          %s153 = scalar_lea.hbm %s0, %s152
          %s154 = sshll.u32 %s147, 4
          %s155 = int_to_ptr.vmem [resolvable:$true] %s154
          %160 = dma.hbm_to_vmem [thread:$0]  %s153, 65536, %s155, %s144, 4096, 2048, 128
        $region24: #{tpu_custom_call.1} parent=19 // pred_fallthru
          _
      $region20: #{tpu_custom_call.1} parent=5 // pred_fallthru
        _
      %p161 = scmp.le.s32.totalorder 1, %s15
      %p162 = scmp.lt.s32.totalorder %s15, 3
      %p163 = pnand %p161, %p162
      %p164 = pneg %p163
      // Predicated region
      $region25: #{tpu_custom_call.1} parent=5 // pred_check
        _
      $region26: #{tpu_custom_call.1} parent=5 // pred_check_branch
        %166 = sbr.rel (%p163) target = $region28
      $region27: #{tpu_custom_call.1} parent=5 // pred_region
        %s167 = ssub.s32 %s15, 1
        %s168 = sand.u32 %s40, 1
        %s169 = scalar_lea.sflag [#allocation3], %s168
        %s170 = sand.u32 %s40, 1
        %s171 = smul.addr %s170, 4096
        %s172 = scalar_lea.vmem [#allocation2], %s171
        // Predicated region
        $region29: #{tpu_custom_call.1} parent=27 // pred_check
          %p173 = pneg %p53
        $region30: #{tpu_custom_call.1} parent=27 // pred_check_branch
          %175 = sbr.rel (%p173) target = $region32
        $region31: #{tpu_custom_call.1} parent=27 // pred_region
          %176 = dma.done %s169, 65536
        $region32: #{tpu_custom_call.1} parent=27 // pred_fallthru
          _
        // Predicated region
        $region33: #{tpu_custom_call.1} parent=27 // pred_check
          %p177 = pneg %p79
        $region34: #{tpu_custom_call.1} parent=27 // pred_check_branch
          %179 = sbr.rel (%p177) target = $region36
        $region35: #{tpu_custom_call.1} parent=27 // pred_region
          %180 = dma.done [#allocation6], 256
        $region36: #{tpu_custom_call.1} parent=27 // pred_fallthru
          _
        %s181 = sand.u32 %s40, 1
        %s182 = scalar_lea.sflag [#allocation3], %s181
        %s183 = sand.u32 %s40, 1
        %s184 = smul.addr %s183, 4096
        %s185 = scalar_lea.vmem [#allocation2], %s184
        %p186 = pneg %p53
        %p187 = pneg %p50
        %p188 = pneg %p79
        %p189 = pneg %p76
        %p190 = pneg %p107
        %p191 = pneg %p104
        %s192 = sand.u32 %s94, 1
        %s193 = scalar_lea.sflag [#allocation4], %s192
        %s194 = sand.u32 %s94, 1
        %s195 = smul.addr %s194, 128
        %s196 = scalar_lea.vmem [#allocation7], %s195
        %s197 = smul.u32 16, %s25
        %s198 = smul.u32 16, %s25
        %v199 = vld [vmem:[#allocation5] sm:$0xff]
        %v200 = vld [vmem:[#allocation5 + $0x8] sm:$0xff]
        %v201 = vld [vmem:[%s172] sm:$0xff]
        %v202 = vld [vmem:[%s172 + $0x8] sm:$0xff]
        %v203 = vld [vmem:[%s172 + $0x10] sm:$0xff]
        %v204 = vld [vmem:[%s172 + $0x18] sm:$0xff]
        %v205 = vld [vmem:[%s172 + $0x20] sm:$0xff]
        %v206 = vld [vmem:[%s172 + $0x28] sm:$0xff]
        %v207 = vld [vmem:[%s172 + $0x30] sm:$0xff]
        %v208 = vld [vmem:[%s172 + $0x38] sm:$0xff]
        %v209 = vld [vmem:[%s172 + $0x40] sm:$0xff]
        %v210 = vld [vmem:[%s172 + $0x48] sm:$0xff]
        %v211 = vld [vmem:[%s172 + $0x50] sm:$0xff]
        %v212 = vld [vmem:[%s172 + $0x58] sm:$0xff]
        %v213 = vld [vmem:[%s172 + $0x60] sm:$0xff]
        %v214 = vld [vmem:[%s172 + $0x68] sm:$0xff]
        %v215 = vld [vmem:[%s172 + $0x70] sm:$0xff]
        %v216 = vld [vmem:[%s172 + $0x78] sm:$0xff]
        %v217 = vld [vmem:[%s172 + $0x80] sm:$0xff]
        %v218 = vld [vmem:[%s172 + $0x88] sm:$0xff]
        %v219 = vld [vmem:[%s172 + $0x90] sm:$0xff]
        %v220 = vld [vmem:[%s172 + $0x98] sm:$0xff]
        %v221 = vld [vmem:[%s172 + $0xa0] sm:$0xff]
        %v222 = vld [vmem:[%s172 + $0xa8] sm:$0xff]
        %v223 = vld [vmem:[%s172 + $0xb0] sm:$0xff]
        %v224 = vld [vmem:[%s172 + $0xb8] sm:$0xff]
        %v225 = vld [vmem:[%s172 + $0xc0] sm:$0xff]
        %v226 = vld [vmem:[%s172 + $0xc8] sm:$0xff]
        %v227 = vld [vmem:[%s172 + $0xd0] sm:$0xff]
        %v228 = vld [vmem:[%s172 + $0xd8] sm:$0xff]
        %v229 = vld [vmem:[%s172 + $0xe0] sm:$0xff]
        %v230 = vld [vmem:[%s172 + $0xe8] sm:$0xff]
        %v231 = vld [vmem:[%s172 + $0xf0] sm:$0xff]
        %v232 = vld [vmem:[%s172 + $0xf8] sm:$0xff]
        %v233 = vld [vmem:[%s172 + $0x100] sm:$0xff]
        %v234 = vld [vmem:[%s172 + $0x108] sm:$0xff]
        %v235 = vld [vmem:[%s172 + $0x110] sm:$0xff]
        %v236 = vld [vmem:[%s172 + $0x118] sm:$0xff]
        %v237 = vld [vmem:[%s172 + $0x120] sm:$0xff]
        %v238 = vld [vmem:[%s172 + $0x128] sm:$0xff]
        %v239 = vld [vmem:[%s172 + $0x130] sm:$0xff]
        %v240 = vld [vmem:[%s172 + $0x138] sm:$0xff]
        %v241 = vld [vmem:[%s172 + $0x140] sm:$0xff]
        %v242 = vld [vmem:[%s172 + $0x148] sm:$0xff]
        %v243 = vld [vmem:[%s172 + $0x150] sm:$0xff]
        %v244 = vld [vmem:[%s172 + $0x158] sm:$0xff]
        %v245 = vld [vmem:[%s172 + $0x160] sm:$0xff]
        %v246 = vld [vmem:[%s172 + $0x168] sm:$0xff]
        %v247 = vld [vmem:[%s172 + $0x170] sm:$0xff]
        %v248 = vld [vmem:[%s172 + $0x178] sm:$0xff]
        %v249 = vld [vmem:[%s172 + $0x180] sm:$0xff]
        %v250 = vld [vmem:[%s172 + $0x188] sm:$0xff]
        %v251 = vld [vmem:[%s172 + $0x190] sm:$0xff]
        %v252 = vld [vmem:[%s172 + $0x198] sm:$0xff]
        %v253 = vld [vmem:[%s172 + $0x1a0] sm:$0xff]
        %v254 = vld [vmem:[%s172 + $0x1a8] sm:$0xff]
        %v255 = vld [vmem:[%s172 + $0x1b0] sm:$0xff]
        %v256 = vld [vmem:[%s172 + $0x1b8] sm:$0xff]
        %v257 = vld [vmem:[%s172 + $0x1c0] sm:$0xff]
        %v258 = vld [vmem:[%s172 + $0x1c8] sm:$0xff]
        %v259 = vld [vmem:[%s172 + $0x1d0] sm:$0xff]
        %v260 = vld [vmem:[%s172 + $0x1d8] sm:$0xff]
        %v261 = vld [vmem:[%s172 + $0x1e0] sm:$0xff]
        %v262 = vld [vmem:[%s172 + $0x1e8] sm:$0xff]
        %v263 = vld [vmem:[%s172 + $0x1f0] sm:$0xff]
        %v264 = vld [vmem:[%s172 + $0x1f8] sm:$0xff]
        %v265 = vld [vmem:[%s172 + $0x200] sm:$0xff]
        %v266 = vld [vmem:[%s172 + $0x208] sm:$0xff]
        %v267 = vld [vmem:[%s172 + $0x210] sm:$0xff]
        %v268 = vld [vmem:[%s172 + $0x218] sm:$0xff]
        %v269 = vld [vmem:[%s172 + $0x220] sm:$0xff]
        %v270 = vld [vmem:[%s172 + $0x228] sm:$0xff]
        %v271 = vld [vmem:[%s172 + $0x230] sm:$0xff]
        %v272 = vld [vmem:[%s172 + $0x238] sm:$0xff]
        %v273 = vld [vmem:[%s172 + $0x240] sm:$0xff]
        %v274 = vld [vmem:[%s172 + $0x248] sm:$0xff]
        %v275 = vld [vmem:[%s172 + $0x250] sm:$0xff]
        %v276 = vld [vmem:[%s172 + $0x258] sm:$0xff]
        %v277 = vld [vmem:[%s172 + $0x260] sm:$0xff]
        %v278 = vld [vmem:[%s172 + $0x268] sm:$0xff]
        %v279 = vld [vmem:[%s172 + $0x270] sm:$0xff]
        %v280 = vld [vmem:[%s172 + $0x278] sm:$0xff]
        %v281 = vld [vmem:[%s172 + $0x280] sm:$0xff]
        %v282 = vld [vmem:[%s172 + $0x288] sm:$0xff]
        %v283 = vld [vmem:[%s172 + $0x290] sm:$0xff]
        %v284 = vld [vmem:[%s172 + $0x298] sm:$0xff]
        %v285 = vld [vmem:[%s172 + $0x2a0] sm:$0xff]
        %v286 = vld [vmem:[%s172 + $0x2a8] sm:$0xff]
        %v287 = vld [vmem:[%s172 + $0x2b0] sm:$0xff]
        %v288 = vld [vmem:[%s172 + $0x2b8] sm:$0xff]
        %v289 = vld [vmem:[%s172 + $0x2c0] sm:$0xff]
        %v290 = vld [vmem:[%s172 + $0x2c8] sm:$0xff]
        %v291 = vld [vmem:[%s172 + $0x2d0] sm:$0xff]
        %v292 = vld [vmem:[%s172 + $0x2d8] sm:$0xff]
        %v293 = vld [vmem:[%s172 + $0x2e0] sm:$0xff]
        %v294 = vld [vmem:[%s172 + $0x2e8] sm:$0xff]
        %v295 = vld [vmem:[%s172 + $0x2f0] sm:$0xff]
        %v296 = vld [vmem:[%s172 + $0x2f8] sm:$0xff]
        %v297 = vld [vmem:[%s172 + $0x300] sm:$0xff]
        %v298 = vld [vmem:[%s172 + $0x308] sm:$0xff]
        %v299 = vld [vmem:[%s172 + $0x310] sm:$0xff]
        %v300 = vld [vmem:[%s172 + $0x318] sm:$0xff]
        %v301 = vld [vmem:[%s172 + $0x320] sm:$0xff]
        %v302 = vld [vmem:[%s172 + $0x328] sm:$0xff]
        %v303 = vld [vmem:[%s172 + $0x330] sm:$0xff]
        %v304 = vld [vmem:[%s172 + $0x338] sm:$0xff]
        %v305 = vld [vmem:[%s172 + $0x340] sm:$0xff]
        %v306 = vld [vmem:[%s172 + $0x348] sm:$0xff]
        %v307 = vld [vmem:[%s172 + $0x350] sm:$0xff]
        %v308 = vld [vmem:[%s172 + $0x358] sm:$0xff]
        %v309 = vld [vmem:[%s172 + $0x360] sm:$0xff]
        %v310 = vld [vmem:[%s172 + $0x368] sm:$0xff]
        %v311 = vld [vmem:[%s172 + $0x370] sm:$0xff]
        %v312 = vld [vmem:[%s172 + $0x378] sm:$0xff]
        %v313 = vld [vmem:[%s172 + $0x380] sm:$0xff]
        %v314 = vld [vmem:[%s172 + $0x388] sm:$0xff]
        %v315 = vld [vmem:[%s172 + $0x390] sm:$0xff]
        %v316 = vld [vmem:[%s172 + $0x398] sm:$0xff]
        %v317 = vld [vmem:[%s172 + $0x3a0] sm:$0xff]
        %v318 = vld [vmem:[%s172 + $0x3a8] sm:$0xff]
        %v319 = vld [vmem:[%s172 + $0x3b0] sm:$0xff]
        %v320 = vld [vmem:[%s172 + $0x3b8] sm:$0xff]
        %v321 = vld [vmem:[%s172 + $0x3c0] sm:$0xff]
        %v322 = vld [vmem:[%s172 + $0x3c8] sm:$0xff]
        %v323 = vld [vmem:[%s172 + $0x3d0] sm:$0xff]
        %v324 = vld [vmem:[%s172 + $0x3d8] sm:$0xff]
        %v325 = vld [vmem:[%s172 + $0x3e0] sm:$0xff]
        %v326 = vld [vmem:[%s172 + $0x3e8] sm:$0xff]
        %v327 = vld [vmem:[%s172 + $0x3f0] sm:$0xff]
        %v328 = vld [vmem:[%s172 + $0x3f8] sm:$0xff]
        %v329 = vld [vmem:[%s172 + $0x400] sm:$0xff]
        %v330 = vld [vmem:[%s172 + $0x408] sm:$0xff]
        %v331 = vld [vmem:[%s172 + $0x410] sm:$0xff]
        %v332 = vld [vmem:[%s172 + $0x418] sm:$0xff]
        %v333 = vld [vmem:[%s172 + $0x420] sm:$0xff]
        %v334 = vld [vmem:[%s172 + $0x428] sm:$0xff]
        %v335 = vld [vmem:[%s172 + $0x430] sm:$0xff]
        %v336 = vld [vmem:[%s172 + $0x438] sm:$0xff]
        %v337 = vld [vmem:[%s172 + $0x440] sm:$0xff]
        %v338 = vld [vmem:[%s172 + $0x448] sm:$0xff]
        %v339 = vld [vmem:[%s172 + $0x450] sm:$0xff]
        %v340 = vld [vmem:[%s172 + $0x458] sm:$0xff]
        %v341 = vld [vmem:[%s172 + $0x460] sm:$0xff]
        %v342 = vld [vmem:[%s172 + $0x468] sm:$0xff]
        %v343 = vld [vmem:[%s172 + $0x470] sm:$0xff]
        %v344 = vld [vmem:[%s172 + $0x478] sm:$0xff]
        %v345 = vld [vmem:[%s172 + $0x480] sm:$0xff]
        %v346 = vld [vmem:[%s172 + $0x488] sm:$0xff]
        %v347 = vld [vmem:[%s172 + $0x490] sm:$0xff]
        %v348 = vld [vmem:[%s172 + $0x498] sm:$0xff]
        %v349 = vld [vmem:[%s172 + $0x4a0] sm:$0xff]
        %v350 = vld [vmem:[%s172 + $0x4a8] sm:$0xff]
        %v351 = vld [vmem:[%s172 + $0x4b0] sm:$0xff]
        %v352 = vld [vmem:[%s172 + $0x4b8] sm:$0xff]
        %v353 = vld [vmem:[%s172 + $0x4c0] sm:$0xff]
        %v354 = vld [vmem:[%s172 + $0x4c8] sm:$0xff]
        %v355 = vld [vmem:[%s172 + $0x4d0] sm:$0xff]
        %v356 = vld [vmem:[%s172 + $0x4d8] sm:$0xff]
        %v357 = vld [vmem:[%s172 + $0x4e0] sm:$0xff]
        %v358 = vld [vmem:[%s172 + $0x4e8] sm:$0xff]
        %v359 = vld [vmem:[%s172 + $0x4f0] sm:$0xff]
        %v360 = vld [vmem:[%s172 + $0x4f8] sm:$0xff]
        %v361 = vld [vmem:[%s172 + $0x500] sm:$0xff]
        %v362 = vld [vmem:[%s172 + $0x508] sm:$0xff]
        %v363 = vld [vmem:[%s172 + $0x510] sm:$0xff]
        %v364 = vld [vmem:[%s172 + $0x518] sm:$0xff]
        %v365 = vld [vmem:[%s172 + $0x520] sm:$0xff]
        %v366 = vld [vmem:[%s172 + $0x528] sm:$0xff]
        %v367 = vld [vmem:[%s172 + $0x530] sm:$0xff]
        %v368 = vld [vmem:[%s172 + $0x538] sm:$0xff]
        %v369 = vld [vmem:[%s172 + $0x540] sm:$0xff]
        %v370 = vld [vmem:[%s172 + $0x548] sm:$0xff]
        %v371 = vld [vmem:[%s172 + $0x550] sm:$0xff]
        %v372 = vld [vmem:[%s172 + $0x558] sm:$0xff]
        %v373 = vld [vmem:[%s172 + $0x560] sm:$0xff]
        %v374 = vld [vmem:[%s172 + $0x568] sm:$0xff]
        %v375 = vld [vmem:[%s172 + $0x570] sm:$0xff]
        %v376 = vld [vmem:[%s172 + $0x578] sm:$0xff]
        %v377 = vld [vmem:[%s172 + $0x580] sm:$0xff]
        %v378 = vld [vmem:[%s172 + $0x588] sm:$0xff]
        %v379 = vld [vmem:[%s172 + $0x590] sm:$0xff]
        %v380 = vld [vmem:[%s172 + $0x598] sm:$0xff]
        %v381 = vld [vmem:[%s172 + $0x5a0] sm:$0xff]
        %v382 = vld [vmem:[%s172 + $0x5a8] sm:$0xff]
        %v383 = vld [vmem:[%s172 + $0x5b0] sm:$0xff]
        %v384 = vld [vmem:[%s172 + $0x5b8] sm:$0xff]
        %v385 = vld [vmem:[%s172 + $0x5c0] sm:$0xff]
        %v386 = vld [vmem:[%s172 + $0x5c8] sm:$0xff]
        %v387 = vld [vmem:[%s172 + $0x5d0] sm:$0xff]
        %v388 = vld [vmem:[%s172 + $0x5d8] sm:$0xff]
        %v389 = vld [vmem:[%s172 + $0x5e0] sm:$0xff]
        %v390 = vld [vmem:[%s172 + $0x5e8] sm:$0xff]
        %v391 = vld [vmem:[%s172 + $0x5f0] sm:$0xff]
        %v392 = vld [vmem:[%s172 + $0x5f8] sm:$0xff]
        %v393 = vld [vmem:[%s172 + $0x600] sm:$0xff]
        %v394 = vld [vmem:[%s172 + $0x608] sm:$0xff]
        %v395 = vld [vmem:[%s172 + $0x610] sm:$0xff]
        %v396 = vld [vmem:[%s172 + $0x618] sm:$0xff]
        %v397 = vld [vmem:[%s172 + $0x620] sm:$0xff]
        %v398 = vld [vmem:[%s172 + $0x628] sm:$0xff]
        %v399 = vld [vmem:[%s172 + $0x630] sm:$0xff]
        %v400 = vld [vmem:[%s172 + $0x638] sm:$0xff]
        %v401 = vld [vmem:[%s172 + $0x640] sm:$0xff]
        %v402 = vld [vmem:[%s172 + $0x648] sm:$0xff]
        %v403 = vld [vmem:[%s172 + $0x650] sm:$0xff]
        %v404 = vld [vmem:[%s172 + $0x658] sm:$0xff]
        %v405 = vld [vmem:[%s172 + $0x660] sm:$0xff]
        %v406 = vld [vmem:[%s172 + $0x668] sm:$0xff]
        %v407 = vld [vmem:[%s172 + $0x670] sm:$0xff]
        %v408 = vld [vmem:[%s172 + $0x678] sm:$0xff]
        %v409 = vld [vmem:[%s172 + $0x680] sm:$0xff]
        %v410 = vld [vmem:[%s172 + $0x688] sm:$0xff]
        %v411 = vld [vmem:[%s172 + $0x690] sm:$0xff]
        %v412 = vld [vmem:[%s172 + $0x698] sm:$0xff]
        %v413 = vld [vmem:[%s172 + $0x6a0] sm:$0xff]
        %v414 = vld [vmem:[%s172 + $0x6a8] sm:$0xff]
        %v415 = vld [vmem:[%s172 + $0x6b0] sm:$0xff]
        %v416 = vld [vmem:[%s172 + $0x6b8] sm:$0xff]
        %v417 = vld [vmem:[%s172 + $0x6c0] sm:$0xff]
        %v418 = vld [vmem:[%s172 + $0x6c8] sm:$0xff]
        %v419 = vld [vmem:[%s172 + $0x6d0] sm:$0xff]
        %v420 = vld [vmem:[%s172 + $0x6d8] sm:$0xff]
        %v421 = vld [vmem:[%s172 + $0x6e0] sm:$0xff]
        %v422 = vld [vmem:[%s172 + $0x6e8] sm:$0xff]
        %v423 = vld [vmem:[%s172 + $0x6f0] sm:$0xff]
        %v424 = vld [vmem:[%s172 + $0x6f8] sm:$0xff]
        %v425 = vld [vmem:[%s172 + $0x700] sm:$0xff]
        %v426 = vld [vmem:[%s172 + $0x708] sm:$0xff]
        %v427 = vld [vmem:[%s172 + $0x710] sm:$0xff]
        %v428 = vld [vmem:[%s172 + $0x718] sm:$0xff]
        %v429 = vld [vmem:[%s172 + $0x720] sm:$0xff]
        %v430 = vld [vmem:[%s172 + $0x728] sm:$0xff]
        %v431 = vld [vmem:[%s172 + $0x730] sm:$0xff]
        %v432 = vld [vmem:[%s172 + $0x738] sm:$0xff]
        %v433 = vld [vmem:[%s172 + $0x740] sm:$0xff]
        %v434 = vld [vmem:[%s172 + $0x748] sm:$0xff]
        %v435 = vld [vmem:[%s172 + $0x750] sm:$0xff]
        %v436 = vld [vmem:[%s172 + $0x758] sm:$0xff]
        %v437 = vld [vmem:[%s172 + $0x760] sm:$0xff]
        %v438 = vld [vmem:[%s172 + $0x768] sm:$0xff]
        %v439 = vld [vmem:[%s172 + $0x770] sm:$0xff]
        %v440 = vld [vmem:[%s172 + $0x778] sm:$0xff]
        %v441 = vld [vmem:[%s172 + $0x780] sm:$0xff]
        %v442 = vld [vmem:[%s172 + $0x788] sm:$0xff]
        %v443 = vld [vmem:[%s172 + $0x790] sm:$0xff]
        %v444 = vld [vmem:[%s172 + $0x798] sm:$0xff]
        %v445 = vld [vmem:[%s172 + $0x7a0] sm:$0xff]
        %v446 = vld [vmem:[%s172 + $0x7a8] sm:$0xff]
        %v447 = vld [vmem:[%s172 + $0x7b0] sm:$0xff]
        %v448 = vld [vmem:[%s172 + $0x7b8] sm:$0xff]
        %v449 = vld [vmem:[%s172 + $0x7c0] sm:$0xff]
        %v450 = vld [vmem:[%s172 + $0x7c8] sm:$0xff]
        %v451 = vld [vmem:[%s172 + $0x7d0] sm:$0xff]
        %v452 = vld [vmem:[%s172 + $0x7d8] sm:$0xff]
        %v453 = vld [vmem:[%s172 + $0x7e0] sm:$0xff]
        %v454 = vld [vmem:[%s172 + $0x7e8] sm:$0xff]
        %v455 = vld [vmem:[%s172 + $0x7f0] sm:$0xff]
        %v456 = vld [vmem:[%s172 + $0x7f8] sm:$0xff]
        %v457 = vld [vmem:[%s172 + $0x800] sm:$0xff]
        %v458 = vld [vmem:[%s172 + $0x808] sm:$0xff]
        %v459 = vld [vmem:[%s172 + $0x810] sm:$0xff]
        %v460 = vld [vmem:[%s172 + $0x818] sm:$0xff]
        %v461 = vld [vmem:[%s172 + $0x820] sm:$0xff]
        %v462 = vld [vmem:[%s172 + $0x828] sm:$0xff]
        %v463 = vld [vmem:[%s172 + $0x830] sm:$0xff]
        %v464 = vld [vmem:[%s172 + $0x838] sm:$0xff]
        %v465 = vld [vmem:[%s172 + $0x840] sm:$0xff]
        %v466 = vld [vmem:[%s172 + $0x848] sm:$0xff]
        %v467 = vld [vmem:[%s172 + $0x850] sm:$0xff]
        %v468 = vld [vmem:[%s172 + $0x858] sm:$0xff]
        %v469 = vld [vmem:[%s172 + $0x860] sm:$0xff]
        %v470 = vld [vmem:[%s172 + $0x868] sm:$0xff]
        %v471 = vld [vmem:[%s172 + $0x870] sm:$0xff]
        %v472 = vld [vmem:[%s172 + $0x878] sm:$0xff]
        %v473 = vld [vmem:[%s172 + $0x880] sm:$0xff]
        %v474 = vld [vmem:[%s172 + $0x888] sm:$0xff]
        %v475 = vld [vmem:[%s172 + $0x890] sm:$0xff]
        %v476 = vld [vmem:[%s172 + $0x898] sm:$0xff]
        %v477 = vld [vmem:[%s172 + $0x8a0] sm:$0xff]
        %v478 = vld [vmem:[%s172 + $0x8a8] sm:$0xff]
        %v479 = vld [vmem:[%s172 + $0x8b0] sm:$0xff]
        %v480 = vld [vmem:[%s172 + $0x8b8] sm:$0xff]
        %v481 = vld [vmem:[%s172 + $0x8c0] sm:$0xff]
        %v482 = vld [vmem:[%s172 + $0x8c8] sm:$0xff]
        %v483 = vld [vmem:[%s172 + $0x8d0] sm:$0xff]
        %v484 = vld [vmem:[%s172 + $0x8d8] sm:$0xff]
        %v485 = vld [vmem:[%s172 + $0x8e0] sm:$0xff]
        %v486 = vld [vmem:[%s172 + $0x8e8] sm:$0xff]
        %v487 = vld [vmem:[%s172 + $0x8f0] sm:$0xff]
        %v488 = vld [vmem:[%s172 + $0x8f8] sm:$0xff]
        %v489 = vld [vmem:[%s172 + $0x900] sm:$0xff]
        %v490 = vld [vmem:[%s172 + $0x908] sm:$0xff]
        %v491 = vld [vmem:[%s172 + $0x910] sm:$0xff]
        %v492 = vld [vmem:[%s172 + $0x918] sm:$0xff]
        %v493 = vld [vmem:[%s172 + $0x920] sm:$0xff]
        %v494 = vld [vmem:[%s172 + $0x928] sm:$0xff]
        %v495 = vld [vmem:[%s172 + $0x930] sm:$0xff]
        %v496 = vld [vmem:[%s172 + $0x938] sm:$0xff]
        %v497 = vld [vmem:[%s172 + $0x940] sm:$0xff]
        %v498 = vld [vmem:[%s172 + $0x948] sm:$0xff]
        %v499 = vld [vmem:[%s172 + $0x950] sm:$0xff]
        %v500 = vld [vmem:[%s172 + $0x958] sm:$0xff]
        %v501 = vld [vmem:[%s172 + $0x960] sm:$0xff]
        %v502 = vld [vmem:[%s172 + $0x968] sm:$0xff]
        %v503 = vld [vmem:[%s172 + $0x970] sm:$0xff]
        %v504 = vld [vmem:[%s172 + $0x978] sm:$0xff]
        %v505 = vld [vmem:[%s172 + $0x980] sm:$0xff]
        %v506 = vld [vmem:[%s172 + $0x988] sm:$0xff]
        %v507 = vld [vmem:[%s172 + $0x990] sm:$0xff]
        %v508 = vld [vmem:[%s172 + $0x998] sm:$0xff]
        %v509 = vld [vmem:[%s172 + $0x9a0] sm:$0xff]
        %v510 = vld [vmem:[%s172 + $0x9a8] sm:$0xff]
        %v511 = vld [vmem:[%s172 + $0x9b0] sm:$0xff]
        %v512 = vld [vmem:[%s172 + $0x9b8] sm:$0xff]
        %v513 = vld [vmem:[%s172 + $0x9c0] sm:$0xff]
        %v514 = vld [vmem:[%s172 + $0x9c8] sm:$0xff]
        %v515 = vld [vmem:[%s172 + $0x9d0] sm:$0xff]
        %v516 = vld [vmem:[%s172 + $0x9d8] sm:$0xff]
        %v517 = vld [vmem:[%s172 + $0x9e0] sm:$0xff]
        %v518 = vld [vmem:[%s172 + $0x9e8] sm:$0xff]
        %v519 = vld [vmem:[%s172 + $0x9f0] sm:$0xff]
        %v520 = vld [vmem:[%s172 + $0x9f8] sm:$0xff]
        %v521 = vld [vmem:[%s172 + $0xa00] sm:$0xff]
        %v522 = vld [vmem:[%s172 + $0xa08] sm:$0xff]
        %v523 = vld [vmem:[%s172 + $0xa10] sm:$0xff]
        %v524 = vld [vmem:[%s172 + $0xa18] sm:$0xff]
        %v525 = vld [vmem:[%s172 + $0xa20] sm:$0xff]
        %v526 = vld [vmem:[%s172 + $0xa28] sm:$0xff]
        %v527 = vld [vmem:[%s172 + $0xa30] sm:$0xff]
        %v528 = vld [vmem:[%s172 + $0xa38] sm:$0xff]
        %v529 = vld [vmem:[%s172 + $0xa40] sm:$0xff]
        %v530 = vld [vmem:[%s172 + $0xa48] sm:$0xff]
        %v531 = vld [vmem:[%s172 + $0xa50] sm:$0xff]
        %v532 = vld [vmem:[%s172 + $0xa58] sm:$0xff]
        %v533 = vld [vmem:[%s172 + $0xa60] sm:$0xff]
        %v534 = vld [vmem:[%s172 + $0xa68] sm:$0xff]
        %v535 = vld [vmem:[%s172 + $0xa70] sm:$0xff]
        %v536 = vld [vmem:[%s172 + $0xa78] sm:$0xff]
        %v537 = vld [vmem:[%s172 + $0xa80] sm:$0xff]
        %v538 = vld [vmem:[%s172 + $0xa88] sm:$0xff]
        %v539 = vld [vmem:[%s172 + $0xa90] sm:$0xff]
        %v540 = vld [vmem:[%s172 + $0xa98] sm:$0xff]
        %v541 = vld [vmem:[%s172 + $0xaa0] sm:$0xff]
        %v542 = vld [vmem:[%s172 + $0xaa8] sm:$0xff]
        %v543 = vld [vmem:[%s172 + $0xab0] sm:$0xff]
        %v544 = vld [vmem:[%s172 + $0xab8] sm:$0xff]
        %v545 = vld [vmem:[%s172 + $0xac0] sm:$0xff]
        %v546 = vld [vmem:[%s172 + $0xac8] sm:$0xff]
        %v547 = vld [vmem:[%s172 + $0xad0] sm:$0xff]
        %v548 = vld [vmem:[%s172 + $0xad8] sm:$0xff]
        %v549 = vld [vmem:[%s172 + $0xae0] sm:$0xff]
        %v550 = vld [vmem:[%s172 + $0xae8] sm:$0xff]
        %v551 = vld [vmem:[%s172 + $0xaf0] sm:$0xff]
        %v552 = vld [vmem:[%s172 + $0xaf8] sm:$0xff]
        %v553 = vld [vmem:[%s172 + $0xb00] sm:$0xff]
        %v554 = vld [vmem:[%s172 + $0xb08] sm:$0xff]
        %v555 = vld [vmem:[%s172 + $0xb10] sm:$0xff]
        %v556 = vld [vmem:[%s172 + $0xb18] sm:$0xff]
        %v557 = vld [vmem:[%s172 + $0xb20] sm:$0xff]
        %v558 = vld [vmem:[%s172 + $0xb28] sm:$0xff]
        %v559 = vld [vmem:[%s172 + $0xb30] sm:$0xff]
        %v560 = vld [vmem:[%s172 + $0xb38] sm:$0xff]
        %v561 = vld [vmem:[%s172 + $0xb40] sm:$0xff]
        %v562 = vld [vmem:[%s172 + $0xb48] sm:$0xff]
        %v563 = vld [vmem:[%s172 + $0xb50] sm:$0xff]
        %v564 = vld [vmem:[%s172 + $0xb58] sm:$0xff]
        %v565 = vld [vmem:[%s172 + $0xb60] sm:$0xff]
        %v566 = vld [vmem:[%s172 + $0xb68] sm:$0xff]
        %v567 = vld [vmem:[%s172 + $0xb70] sm:$0xff]
        %v568 = vld [vmem:[%s172 + $0xb78] sm:$0xff]
        %v569 = vld [vmem:[%s172 + $0xb80] sm:$0xff]
        %v570 = vld [vmem:[%s172 + $0xb88] sm:$0xff]
        %v571 = vld [vmem:[%s172 + $0xb90] sm:$0xff]
        %v572 = vld [vmem:[%s172 + $0xb98] sm:$0xff]
        %v573 = vld [vmem:[%s172 + $0xba0] sm:$0xff]
        %v574 = vld [vmem:[%s172 + $0xba8] sm:$0xff]
        %v575 = vld [vmem:[%s172 + $0xbb0] sm:$0xff]
        %v576 = vld [vmem:[%s172 + $0xbb8] sm:$0xff]
        %v577 = vld [vmem:[%s172 + $0xbc0] sm:$0xff]
        %v578 = vld [vmem:[%s172 + $0xbc8] sm:$0xff]
        %v579 = vld [vmem:[%s172 + $0xbd0] sm:$0xff]
        %v580 = vld [vmem:[%s172 + $0xbd8] sm:$0xff]
        %v581 = vld [vmem:[%s172 + $0xbe0] sm:$0xff]
        %v582 = vld [vmem:[%s172 + $0xbe8] sm:$0xff]
        %v583 = vld [vmem:[%s172 + $0xbf0] sm:$0xff]
        %v584 = vld [vmem:[%s172 + $0xbf8] sm:$0xff]
        %v585 = vld [vmem:[%s172 + $0xc00] sm:$0xff]
        %v586 = vld [vmem:[%s172 + $0xc08] sm:$0xff]
        %v587 = vld [vmem:[%s172 + $0xc10] sm:$0xff]
        %v588 = vld [vmem:[%s172 + $0xc18] sm:$0xff]
        %v589 = vld [vmem:[%s172 + $0xc20] sm:$0xff]
        %v590 = vld [vmem:[%s172 + $0xc28] sm:$0xff]
        %v591 = vld [vmem:[%s172 + $0xc30] sm:$0xff]
        %v592 = vld [vmem:[%s172 + $0xc38] sm:$0xff]
        %v593 = vld [vmem:[%s172 + $0xc40] sm:$0xff]
        %v594 = vld [vmem:[%s172 + $0xc48] sm:$0xff]
        %v595 = vld [vmem:[%s172 + $0xc50] sm:$0xff]
        %v596 = vld [vmem:[%s172 + $0xc58] sm:$0xff]
        %v597 = vld [vmem:[%s172 + $0xc60] sm:$0xff]
        %v598 = vld [vmem:[%s172 + $0xc68] sm:$0xff]
        %v599 = vld [vmem:[%s172 + $0xc70] sm:$0xff]
        %v600 = vld [vmem:[%s172 + $0xc78] sm:$0xff]
        %v601 = vld [vmem:[%s172 + $0xc80] sm:$0xff]
        %v602 = vld [vmem:[%s172 + $0xc88] sm:$0xff]
        %v603 = vld [vmem:[%s172 + $0xc90] sm:$0xff]
        %v604 = vld [vmem:[%s172 + $0xc98] sm:$0xff]
        %v605 = vld [vmem:[%s172 + $0xca0] sm:$0xff]
        %v606 = vld [vmem:[%s172 + $0xca8] sm:$0xff]
        %v607 = vld [vmem:[%s172 + $0xcb0] sm:$0xff]
        %v608 = vld [vmem:[%s172 + $0xcb8] sm:$0xff]
        %v609 = vld [vmem:[%s172 + $0xcc0] sm:$0xff]
        %v610 = vld [vmem:[%s172 + $0xcc8] sm:$0xff]
        %v611 = vld [vmem:[%s172 + $0xcd0] sm:$0xff]
        %v612 = vld [vmem:[%s172 + $0xcd8] sm:$0xff]
        %v613 = vld [vmem:[%s172 + $0xce0] sm:$0xff]
        %v614 = vld [vmem:[%s172 + $0xce8] sm:$0xff]
        %v615 = vld [vmem:[%s172 + $0xcf0] sm:$0xff]
        %v616 = vld [vmem:[%s172 + $0xcf8] sm:$0xff]
        %v617 = vld [vmem:[%s172 + $0xd00] sm:$0xff]
        %v618 = vld [vmem:[%s172 + $0xd08] sm:$0xff]
        %v619 = vld [vmem:[%s172 + $0xd10] sm:$0xff]
        %v620 = vld [vmem:[%s172 + $0xd18] sm:$0xff]
        %v621 = vld [vmem:[%s172 + $0xd20] sm:$0xff]
        %v622 = vld [vmem:[%s172 + $0xd28] sm:$0xff]
        %v623 = vld [vmem:[%s172 + $0xd30] sm:$0xff]
        %v624 = vld [vmem:[%s172 + $0xd38] sm:$0xff]
        %v625 = vld [vmem:[%s172 + $0xd40] sm:$0xff]
        %v626 = vld [vmem:[%s172 + $0xd48] sm:$0xff]
        %v627 = vld [vmem:[%s172 + $0xd50] sm:$0xff]
        %v628 = vld [vmem:[%s172 + $0xd58] sm:$0xff]
        %v629 = vld [vmem:[%s172 + $0xd60] sm:$0xff]
        %v630 = vld [vmem:[%s172 + $0xd68] sm:$0xff]
        %v631 = vld [vmem:[%s172 + $0xd70] sm:$0xff]
        %v632 = vld [vmem:[%s172 + $0xd78] sm:$0xff]
        %v633 = vld [vmem:[%s172 + $0xd80] sm:$0xff]
        %v634 = vld [vmem:[%s172 + $0xd88] sm:$0xff]
        %v635 = vld [vmem:[%s172 + $0xd90] sm:$0xff]
        %v636 = vld [vmem:[%s172 + $0xd98] sm:$0xff]
        %v637 = vld [vmem:[%s172 + $0xda0] sm:$0xff]
        %v638 = vld [vmem:[%s172 + $0xda8] sm:$0xff]
        %v639 = vld [vmem:[%s172 + $0xdb0] sm:$0xff]
        %v640 = vld [vmem:[%s172 + $0xdb8] sm:$0xff]
        %v641 = vld [vmem:[%s172 + $0xdc0] sm:$0xff]
        %v642 = vld [vmem:[%s172 + $0xdc8] sm:$0xff]
        %v643 = vld [vmem:[%s172 + $0xdd0] sm:$0xff]
        %v644 = vld [vmem:[%s172 + $0xdd8] sm:$0xff]
        %v645 = vld [vmem:[%s172 + $0xde0] sm:$0xff]
        %v646 = vld [vmem:[%s172 + $0xde8] sm:$0xff]
        %v647 = vld [vmem:[%s172 + $0xdf0] sm:$0xff]
        %v648 = vld [vmem:[%s172 + $0xdf8] sm:$0xff]
        %v649 = vld [vmem:[%s172 + $0xe00] sm:$0xff]
        %v650 = vld [vmem:[%s172 + $0xe08] sm:$0xff]
        %v651 = vld [vmem:[%s172 + $0xe10] sm:$0xff]
        %v652 = vld [vmem:[%s172 + $0xe18] sm:$0xff]
        %v653 = vld [vmem:[%s172 + $0xe20] sm:$0xff]
        %v654 = vld [vmem:[%s172 + $0xe28] sm:$0xff]
        %v655 = vld [vmem:[%s172 + $0xe30] sm:$0xff]
        %v656 = vld [vmem:[%s172 + $0xe38] sm:$0xff]
        %v657 = vld [vmem:[%s172 + $0xe40] sm:$0xff]
        %v658 = vld [vmem:[%s172 + $0xe48] sm:$0xff]
        %v659 = vld [vmem:[%s172 + $0xe50] sm:$0xff]
        %v660 = vld [vmem:[%s172 + $0xe58] sm:$0xff]
        %v661 = vld [vmem:[%s172 + $0xe60] sm:$0xff]
        %v662 = vld [vmem:[%s172 + $0xe68] sm:$0xff]
        %v663 = vld [vmem:[%s172 + $0xe70] sm:$0xff]
        %v664 = vld [vmem:[%s172 + $0xe78] sm:$0xff]
        %v665 = vld [vmem:[%s172 + $0xe80] sm:$0xff]
        %v666 = vld [vmem:[%s172 + $0xe88] sm:$0xff]
        %v667 = vld [vmem:[%s172 + $0xe90] sm:$0xff]
        %v668 = vld [vmem:[%s172 + $0xe98] sm:$0xff]
        %v669 = vld [vmem:[%s172 + $0xea0] sm:$0xff]
        %v670 = vld [vmem:[%s172 + $0xea8] sm:$0xff]
        %v671 = vld [vmem:[%s172 + $0xeb0] sm:$0xff]
        %v672 = vld [vmem:[%s172 + $0xeb8] sm:$0xff]
        %v673 = vld [vmem:[%s172 + $0xec0] sm:$0xff]
        %v674 = vld [vmem:[%s172 + $0xec8] sm:$0xff]
        %v675 = vld [vmem:[%s172 + $0xed0] sm:$0xff]
        %v676 = vld [vmem:[%s172 + $0xed8] sm:$0xff]
        %v677 = vld [vmem:[%s172 + $0xee0] sm:$0xff]
        %v678 = vld [vmem:[%s172 + $0xee8] sm:$0xff]
        %v679 = vld [vmem:[%s172 + $0xef0] sm:$0xff]
        %v680 = vld [vmem:[%s172 + $0xef8] sm:$0xff]
        %v681 = vld [vmem:[%s172 + $0xf00] sm:$0xff]
        %v682 = vld [vmem:[%s172 + $0xf08] sm:$0xff]
        %v683 = vld [vmem:[%s172 + $0xf10] sm:$0xff]
        %v684 = vld [vmem:[%s172 + $0xf18] sm:$0xff]
        %v685 = vld [vmem:[%s172 + $0xf20] sm:$0xff]
        %v686 = vld [vmem:[%s172 + $0xf28] sm:$0xff]
        %v687 = vld [vmem:[%s172 + $0xf30] sm:$0xff]
        %v688 = vld [vmem:[%s172 + $0xf38] sm:$0xff]
        %v689 = vld [vmem:[%s172 + $0xf40] sm:$0xff]
        %v690 = vld [vmem:[%s172 + $0xf48] sm:$0xff]
        %v691 = vld [vmem:[%s172 + $0xf50] sm:$0xff]
        %v692 = vld [vmem:[%s172 + $0xf58] sm:$0xff]
        %v693 = vld [vmem:[%s172 + $0xf60] sm:$0xff]
        %v694 = vld [vmem:[%s172 + $0xf68] sm:$0xff]
        %v695 = vld [vmem:[%s172 + $0xf70] sm:$0xff]
        %v696 = vld [vmem:[%s172 + $0xf78] sm:$0xff]
        %v697 = vld [vmem:[%s172 + $0xf80] sm:$0xff]
        %v698 = vld [vmem:[%s172 + $0xf88] sm:$0xff]
        %v699 = vld [vmem:[%s172 + $0xf90] sm:$0xff]
        %v700 = vld [vmem:[%s172 + $0xf98] sm:$0xff]
        %v701 = vld [vmem:[%s172 + $0xfa0] sm:$0xff]
        %v702 = vld [vmem:[%s172 + $0xfa8] sm:$0xff]
        %v703 = vld [vmem:[%s172 + $0xfb0] sm:$0xff]
        %v704 = vld [vmem:[%s172 + $0xfb8] sm:$0xff]
        %v705 = vld [vmem:[%s172 + $0xfc0] sm:$0xff]
        %v706 = vld [vmem:[%s172 + $0xfc8] sm:$0xff]
        %v707 = vld [vmem:[%s172 + $0xfd0] sm:$0xff]
        %v708 = vld [vmem:[%s172 + $0xfd8] sm:$0xff]
        %v709 = vld [vmem:[%s172 + $0xfe0] sm:$0xff]
        %v710 = vld [vmem:[%s172 + $0xfe8] sm:$0xff]
        %v711 = vld [vmem:[%s172 + $0xff0] sm:$0xff]
        %v712 = vld [vmem:[%s172 + $0xff8] sm:$0xff]
        %713 = vmatprep.subr.mxu0 %v442
        %714 = vmatpush1.msra.mxu0 %v441
        %715 = vmatprep.subr.mxu0 %v426
        %716 = vmatpush1.msra.mxu0 %v425
        %717 = vmatprep.subr.mxu0 %v410
        %718 = vmatpush1.msra.mxu0 %v409
        %719 = vmatprep.subr.mxu0 %v394
        %720 = vmatpush1.msra.mxu0 %v393
        %721 = vmatprep.subr.mxu0 %v378
        %722 = vmatpush1.msra.mxu0 %v377
        %723 = vmatprep.subr.mxu0 %v362
        %724 = vmatpush1.msra.mxu0 %v361
        %725 = vmatprep.subr.mxu0 %v346
        %726 = vmatpush1.msra.mxu0 %v345
        %727 = vmatprep.subr.mxu0 %v330
        %728 = vmatpush1.msra.mxu0 %v329
        %729 = vmatprep.subr.mxu0 %v314
        %730 = vmatpush1.msra.mxu0 %v313
        %731 = vmatprep.subr.mxu0 %v298
        %732 = vmatpush1.msra.mxu0 %v297
        %733 = vmatprep.subr.mxu0 %v282
        %734 = vmatpush1.msra.mxu0 %v281
        %735 = vmatprep.subr.mxu0 %v266
        %736 = vmatpush1.msra.mxu0 %v265
        %737 = vmatprep.subr.mxu0 %v250
        %738 = vmatpush1.msra.mxu0 %v249
        %739 = vmatprep.subr.mxu0 %v234
        %740 = vmatpush1.msra.mxu0 %v233
        %741 = vmatprep.subr.mxu0 %v218
        %742 = vmatpush1.msra.mxu0 %v217
        %743 = vmatprep.subr.mxu0 %v202
        %744 = vmatpush1.msra.mxu0 %v201
        %745 = vmatprep.subr.mxu0 %v698
        %746 = vmatpush2.msra.mxu0 %v697
        %747 = vmatprep.subr.mxu0 %v682
        %748 = vmatpush2.msra.mxu0 %v681
        %749 = vmatprep.subr.mxu0 %v666
        %750 = vmatpush2.msra.mxu0 %v665
        %751 = vmatprep.subr.mxu0 %v650
        %752 = vmatpush2.msra.mxu0 %v649
        %753 = vmatprep.subr.mxu0 %v634
        %754 = vmatpush2.msra.mxu0 %v633
        %755 = vmatprep.subr.mxu0 %v618
        %756 = vmatpush2.msra.mxu0 %v617
        %757 = vmatprep.subr.mxu0 %v602
        %758 = vmatpush2.msra.mxu0 %v601
        %759 = vmatprep.subr.mxu0 %v586
        %760 = vmatpush2.msra.mxu0 %v585
        %761 = vmatprep.subr.mxu0 %v570
        %762 = vmatpush2.msra.mxu0 %v569
        %763 = vmatprep.subr.mxu0 %v554
        %764 = vmatpush2.msra.mxu0 %v553
        %765 = vmatprep.subr.mxu0 %v538
        %766 = vmatpush2.msra.mxu0 %v537
        %767 = vmatprep.subr.mxu0 %v522
        %768 = vmatpush2.msra.mxu0 %v521
        %769 = vmatprep.subr.mxu0 %v506
        %770 = vmatpush2.msra.mxu0 %v505
        %771 = vmatprep.subr.mxu0 %v490
        %772 = vmatpush2.msra.mxu0 %v489
        %773 = vmatprep.subr.mxu0 %v474
        %774 = vmatpush2.msra.mxu0 %v473
        %775 = vmatprep.subr.mxu0 %v458
        %776 = vmatpush2.msra.mxu0 %v457
        %777 = vmatprep.mubr.f32.mxu0 %v200
        %778 = vmatmul.mubr.f32.gmra.mxu0 %v199
        %v779 = vpop.f32.mrf.mxu0
        %v780 = vadd.f32 0.0, %v779
        %v781 = vpop.f32.mrf.mxu0
        %v782 = vadd.f32 0.0, %v781
        %783 = vdwg.mxu0
        %784 = vmatprep.subr.mxu0 %v444
        %785 = vmatpush1.msra.mxu0 %v443
        %786 = vmatprep.subr.mxu0 %v428
        %787 = vmatpush1.msra.mxu0 %v427
        %788 = vmatprep.subr.mxu0 %v412
        %789 = vmatpush1.msra.mxu0 %v411
        %790 = vmatprep.subr.mxu0 %v396
        %791 = vmatpush1.msra.mxu0 %v395
        %792 = vmatprep.subr.mxu0 %v380
        %793 = vmatpush1.msra.mxu0 %v379
        %794 = vmatprep.subr.mxu0 %v364
        %795 = vmatpush1.msra.mxu0 %v363
        %796 = vmatprep.subr.mxu0 %v348
        %797 = vmatpush1.msra.mxu0 %v347
        %798 = vmatprep.subr.mxu0 %v332
        %799 = vmatpush1.msra.mxu0 %v331
        %800 = vmatprep.subr.mxu0 %v316
        %801 = vmatpush1.msra.mxu0 %v315
        %802 = vmatprep.subr.mxu0 %v300
        %803 = vmatpush1.msra.mxu0 %v299
        %804 = vmatprep.subr.mxu0 %v284
        %805 = vmatpush1.msra.mxu0 %v283
        %806 = vmatprep.subr.mxu0 %v268
        %807 = vmatpush1.msra.mxu0 %v267
        %808 = vmatprep.subr.mxu0 %v252
        %809 = vmatpush1.msra.mxu0 %v251
        %810 = vmatprep.subr.mxu0 %v236
        %811 = vmatpush1.msra.mxu0 %v235
        %812 = vmatprep.subr.mxu0 %v220
        %813 = vmatpush1.msra.mxu0 %v219
        %814 = vmatprep.subr.mxu0 %v204
        %815 = vmatpush1.msra.mxu0 %v203
        %816 = vmatprep.subr.mxu0 %v700
        %817 = vmatpush2.msra.mxu0 %v699
        %818 = vmatprep.subr.mxu0 %v684
        %819 = vmatpush2.msra.mxu0 %v683
        %820 = vmatprep.subr.mxu0 %v668
        %821 = vmatpush2.msra.mxu0 %v667
        %822 = vmatprep.subr.mxu0 %v652
        %823 = vmatpush2.msra.mxu0 %v651
        %824 = vmatprep.subr.mxu0 %v636
        %825 = vmatpush2.msra.mxu0 %v635
        %826 = vmatprep.subr.mxu0 %v620
        %827 = vmatpush2.msra.mxu0 %v619
        %828 = vmatprep.subr.mxu0 %v604
        %829 = vmatpush2.msra.mxu0 %v603
        %830 = vmatprep.subr.mxu0 %v588
        %831 = vmatpush2.msra.mxu0 %v587
        %832 = vmatprep.subr.mxu0 %v572
        %833 = vmatpush2.msra.mxu0 %v571
        %834 = vmatprep.subr.mxu0 %v556
        %835 = vmatpush2.msra.mxu0 %v555
        %836 = vmatprep.subr.mxu0 %v540
        %837 = vmatpush2.msra.mxu0 %v539
        %838 = vmatprep.subr.mxu0 %v524
        %839 = vmatpush2.msra.mxu0 %v523
        %840 = vmatprep.subr.mxu0 %v508
        %841 = vmatpush2.msra.mxu0 %v507
        %842 = vmatprep.subr.mxu0 %v492
        %843 = vmatpush2.msra.mxu0 %v491
        %844 = vmatprep.subr.mxu0 %v476
        %845 = vmatpush2.msra.mxu0 %v475
        %846 = vmatprep.subr.mxu0 %v460
        %847 = vmatpush2.msra.mxu0 %v459
        %848 = vmatprep.mubr.f32.mxu0 %v200
        %849 = vmatmul.mubr.f32.gmra.mxu0 %v199
        %v850 = vpop.f32.mrf.mxu0
        %v851 = vadd.f32 0.0, %v850
        %v852 = vpop.f32.mrf.mxu0
        %v853 = vadd.f32 0.0, %v852
        %854 = vdwg.mxu0
        %855 = vmatprep.subr.mxu0 %v446
        %856 = vmatpush1.msra.mxu0 %v445
        %857 = vmatprep.subr.mxu0 %v430
        %858 = vmatpush1.msra.mxu0 %v429
        %859 = vmatprep.subr.mxu0 %v414
        %860 = vmatpush1.msra.mxu0 %v413
        %861 = vmatprep.subr.mxu0 %v398
        %862 = vmatpush1.msra.mxu0 %v397
        %863 = vmatprep.subr.mxu0 %v382
        %864 = vmatpush1.msra.mxu0 %v381
        %865 = vmatprep.subr.mxu0 %v366
        %866 = vmatpush1.msra.mxu0 %v365
        %867 = vmatprep.subr.mxu0 %v350
        %868 = vmatpush1.msra.mxu0 %v349
        %869 = vmatprep.subr.mxu0 %v334
        %870 = vmatpush1.msra.mxu0 %v333
        %871 = vmatprep.subr.mxu0 %v318
        %872 = vmatpush1.msra.mxu0 %v317
        %873 = vmatprep.subr.mxu0 %v302
        %874 = vmatpush1.msra.mxu0 %v301
        %875 = vmatprep.subr.mxu0 %v286
        %876 = vmatpush1.msra.mxu0 %v285
        %877 = vmatprep.subr.mxu0 %v270
        %878 = vmatpush1.msra.mxu0 %v269
        %879 = vmatprep.subr.mxu0 %v254
        %880 = vmatpush1.msra.mxu0 %v253
        %881 = vmatprep.subr.mxu0 %v238
        %882 = vmatpush1.msra.mxu0 %v237
        %883 = vmatprep.subr.mxu0 %v222
        %884 = vmatpush1.msra.mxu0 %v221
        %885 = vmatprep.subr.mxu0 %v206
        %886 = vmatpush1.msra.mxu0 %v205
        %887 = vmatprep.subr.mxu0 %v702
        %888 = vmatpush2.msra.mxu0 %v701
        %889 = vmatprep.subr.mxu0 %v686
        %890 = vmatpush2.msra.mxu0 %v685
        %891 = vmatprep.subr.mxu0 %v670
        %892 = vmatpush2.msra.mxu0 %v669
        %893 = vmatprep.subr.mxu0 %v654
        %894 = vmatpush2.msra.mxu0 %v653
        %895 = vmatprep.subr.mxu0 %v638
        %896 = vmatpush2.msra.mxu0 %v637
        %897 = vmatprep.subr.mxu0 %v622
        %898 = vmatpush2.msra.mxu0 %v621
        %899 = vmatprep.subr.mxu0 %v606
        %900 = vmatpush2.msra.mxu0 %v605
        %901 = vmatprep.subr.mxu0 %v590
        %902 = vmatpush2.msra.mxu0 %v589
        %903 = vmatprep.subr.mxu0 %v574
        %904 = vmatpush2.msra.mxu0 %v573
        %905 = vmatprep.subr.mxu0 %v558
        %906 = vmatpush2.msra.mxu0 %v557
        %907 = vmatprep.subr.mxu0 %v542
        %908 = vmatpush2.msra.mxu0 %v541
        %909 = vmatprep.subr.mxu0 %v526
        %910 = vmatpush2.msra.mxu0 %v525
        %911 = vmatprep.subr.mxu0 %v510
        %912 = vmatpush2.msra.mxu0 %v509
        %913 = vmatprep.subr.mxu0 %v494
        %914 = vmatpush2.msra.mxu0 %v493
        %915 = vmatprep.subr.mxu0 %v478
        %916 = vmatpush2.msra.mxu0 %v477
        %917 = vmatprep.subr.mxu0 %v462
        %918 = vmatpush2.msra.mxu0 %v461
        %919 = vmatprep.mubr.f32.mxu0 %v200
        %920 = vmatmul.mubr.f32.gmra.mxu0 %v199
        %v921 = vpop.f32.mrf.mxu0
        %v922 = vadd.f32 0.0, %v921
        %v923 = vpop.f32.mrf.mxu0
        %v924 = vadd.f32 0.0, %v923
        %925 = vdwg.mxu0
        %926 = vmatprep.subr.mxu0 %v448
        %927 = vmatpush1.msra.mxu0 %v447
        %928 = vmatprep.subr.mxu0 %v432
        %929 = vmatpush1.msra.mxu0 %v431
        %930 = vmatprep.subr.mxu0 %v416
        %931 = vmatpush1.msra.mxu0 %v415
        %932 = vmatprep.subr.mxu0 %v400
        %933 = vmatpush1.msra.mxu0 %v399
        %934 = vmatprep.subr.mxu0 %v384
        %935 = vmatpush1.msra.mxu0 %v383
        %936 = vmatprep.subr.mxu0 %v368
        %937 = vmatpush1.msra.mxu0 %v367
        %938 = vmatprep.subr.mxu0 %v352
        %939 = vmatpush1.msra.mxu0 %v351
        %940 = vmatprep.subr.mxu0 %v336
        %941 = vmatpush1.msra.mxu0 %v335
        %942 = vmatprep.subr.mxu0 %v320
        %943 = vmatpush1.msra.mxu0 %v319
        %944 = vmatprep.subr.mxu0 %v304
        %945 = vmatpush1.msra.mxu0 %v303
        %946 = vmatprep.subr.mxu0 %v288
        %947 = vmatpush1.msra.mxu0 %v287
        %948 = vmatprep.subr.mxu0 %v272
        %949 = vmatpush1.msra.mxu0 %v271
        %950 = vmatprep.subr.mxu0 %v256
        %951 = vmatpush1.msra.mxu0 %v255
        %952 = vmatprep.subr.mxu0 %v240
        %953 = vmatpush1.msra.mxu0 %v239
        %954 = vmatprep.subr.mxu0 %v224
        %955 = vmatpush1.msra.mxu0 %v223
        %956 = vmatprep.subr.mxu0 %v208
        %957 = vmatpush1.msra.mxu0 %v207
        %958 = vmatprep.subr.mxu0 %v704
        %959 = vmatpush2.msra.mxu0 %v703
        %960 = vmatprep.subr.mxu0 %v688
        %961 = vmatpush2.msra.mxu0 %v687
        %962 = vmatprep.subr.mxu0 %v672
        %963 = vmatpush2.msra.mxu0 %v671
        %964 = vmatprep.subr.mxu0 %v656
        %965 = vmatpush2.msra.mxu0 %v655
        %966 = vmatprep.subr.mxu0 %v640
        %967 = vmatpush2.msra.mxu0 %v639
        %968 = vmatprep.subr.mxu0 %v624
        %969 = vmatpush2.msra.mxu0 %v623
        %970 = vmatprep.subr.mxu0 %v608
        %971 = vmatpush2.msra.mxu0 %v607
        %972 = vmatprep.subr.mxu0 %v592
        %973 = vmatpush2.msra.mxu0 %v591
        %974 = vmatprep.subr.mxu0 %v576
        %975 = vmatpush2.msra.mxu0 %v575
        %976 = vmatprep.subr.mxu0 %v560
        %977 = vmatpush2.msra.mxu0 %v559
        %978 = vmatprep.subr.mxu0 %v544
        %979 = vmatpush2.msra.mxu0 %v543
        %980 = vmatprep.subr.mxu0 %v528
        %981 = vmatpush2.msra.mxu0 %v527
        %982 = vmatprep.subr.mxu0 %v512
        %983 = vmatpush2.msra.mxu0 %v511
        %984 = vmatprep.subr.mxu0 %v496
        %985 = vmatpush2.msra.mxu0 %v495
        %986 = vmatprep.subr.mxu0 %v480
        %987 = vmatpush2.msra.mxu0 %v479
        %988 = vmatprep.subr.mxu0 %v464
        %989 = vmatpush2.msra.mxu0 %v463
        %990 = vmatprep.mubr.f32.mxu0 %v200
        %991 = vmatmul.mubr.f32.gmra.mxu0 %v199
        %v992 = vpop.f32.mrf.mxu0
        %v993 = vadd.f32 0.0, %v992
        %v994 = vpop.f32.mrf.mxu0
        %v995 = vadd.f32 0.0, %v994
        %996 = vdwg.mxu0
        %997 = vmatprep.subr.mxu0 %v450
        %998 = vmatpush1.msra.mxu0 %v449
        %999 = vmatprep.subr.mxu0 %v434
        %1000 = vmatpush1.msra.mxu0 %v433
        %1001 = vmatprep.subr.mxu0 %v418
        %1002 = vmatpush1.msra.mxu0 %v417
        %1003 = vmatprep.subr.mxu0 %v402
        %1004 = vmatpush1.msra.mxu0 %v401
        %1005 = vmatprep.subr.mxu0 %v386
        %1006 = vmatpush1.msra.mxu0 %v385
        %1007 = vmatprep.subr.mxu0 %v370
        %1008 = vmatpush1.msra.mxu0 %v369
        %1009 = vmatprep.subr.mxu0 %v354
        %1010 = vmatpush1.msra.mxu0 %v353
        %1011 = vmatprep.subr.mxu0 %v338
        %1012 = vmatpush1.msra.mxu0 %v337
        %1013 = vmatprep.subr.mxu0 %v322
        %1014 = vmatpush1.msra.mxu0 %v321
        %1015 = vmatprep.subr.mxu0 %v306
        %1016 = vmatpush1.msra.mxu0 %v305
        %1017 = vmatprep.subr.mxu0 %v290
        %1018 = vmatpush1.msra.mxu0 %v289
        %1019 = vmatprep.subr.mxu0 %v274
        %1020 = vmatpush1.msra.mxu0 %v273
        %1021 = vmatprep.subr.mxu0 %v258
        %1022 = vmatpush1.msra.mxu0 %v257
        %1023 = vmatprep.subr.mxu0 %v242
        %1024 = vmatpush1.msra.mxu0 %v241
        %1025 = vmatprep.subr.mxu0 %v226
        %1026 = vmatpush1.msra.mxu0 %v225
        %1027 = vmatprep.subr.mxu0 %v210
        %1028 = vmatpush1.msra.mxu0 %v209
        %1029 = vmatprep.subr.mxu0 %v706
        %1030 = vmatpush2.msra.mxu0 %v705
        %1031 = vmatprep.subr.mxu0 %v690
        %1032 = vmatpush2.msra.mxu0 %v689
        %1033 = vmatprep.subr.mxu0 %v674
        %1034 = vmatpush2.msra.mxu0 %v673
        %1035 = vmatprep.subr.mxu0 %v658
        %1036 = vmatpush2.msra.mxu0 %v657
        %1037 = vmatprep.subr.mxu0 %v642
        %1038 = vmatpush2.msra.mxu0 %v641
        %1039 = vmatprep.subr.mxu0 %v626
        %1040 = vmatpush2.msra.mxu0 %v625
        %1041 = vmatprep.subr.mxu0 %v610
        %1042 = vmatpush2.msra.mxu0 %v609
        %1043 = vmatprep.subr.mxu0 %v594
        %1044 = vmatpush2.msra.mxu0 %v593
        %1045 = vmatprep.subr.mxu0 %v578
        %1046 = vmatpush2.msra.mxu0 %v577
        %1047 = vmatprep.subr.mxu0 %v562
        %1048 = vmatpush2.msra.mxu0 %v561
        %1049 = vmatprep.subr.mxu0 %v546
        %1050 = vmatpush2.msra.mxu0 %v545
        %1051 = vmatprep.subr.mxu0 %v530
        %1052 = vmatpush2.msra.mxu0 %v529
        %1053 = vmatprep.subr.mxu0 %v514
        %1054 = vmatpush2.msra.mxu0 %v513
        %1055 = vmatprep.subr.mxu0 %v498
        %1056 = vmatpush2.msra.mxu0 %v497
        %1057 = vmatprep.subr.mxu0 %v482
        %1058 = vmatpush2.msra.mxu0 %v481
        %1059 = vmatprep.subr.mxu0 %v466
        %1060 = vmatpush2.msra.mxu0 %v465
        %1061 = vmatprep.mubr.f32.mxu0 %v200
        %1062 = vmatmul.mubr.f32.gmra.mxu0 %v199
        %v1063 = vpop.f32.mrf.mxu0
        %v1064 = vadd.f32 0.0, %v1063
        %v1065 = vpop.f32.mrf.mxu0
        %v1066 = vadd.f32 0.0, %v1065
        %1067 = vdwg.mxu0
        %1068 = vmatprep.subr.mxu0 %v452
        %1069 = vmatpush1.msra.mxu0 %v451
        %1070 = vmatprep.subr.mxu0 %v436
        %1071 = vmatpush1.msra.mxu0 %v435
        %1072 = vmatprep.subr.mxu0 %v420
        %1073 = vmatpush1.msra.mxu0 %v419
        %1074 = vmatprep.subr.mxu0 %v404
        %1075 = vmatpush1.msra.mxu0 %v403
        %1076 = vmatprep.subr.mxu0 %v388
        %1077 = vmatpush1.msra.mxu0 %v387
        %1078 = vmatprep.subr.mxu0 %v372
        %1079 = vmatpush1.msra.mxu0 %v371
        %1080 = vmatprep.subr.mxu0 %v356
        %1081 = vmatpush1.msra.mxu0 %v355
        %1082 = vmatprep.subr.mxu0 %v340
        %1083 = vmatpush1.msra.mxu0 %v339
        %1084 = vmatprep.subr.mxu0 %v324
        %1085 = vmatpush1.msra.mxu0 %v323
        %1086 = vmatprep.subr.mxu0 %v308
        %1087 = vmatpush1.msra.mxu0 %v307
        %1088 = vmatprep.subr.mxu0 %v292
        %1089 = vmatpush1.msra.mxu0 %v291
        %1090 = vmatprep.subr.mxu0 %v276
        %1091 = vmatpush1.msra.mxu0 %v275
        %1092 = vmatprep.subr.mxu0 %v260
        %1093 = vmatpush1.msra.mxu0 %v259
        %1094 = vmatprep.subr.mxu0 %v244
        %1095 = vmatpush1.msra.mxu0 %v243
        %1096 = vmatprep.subr.mxu0 %v228
        %1097 = vmatpush1.msra.mxu0 %v227
        %1098 = vmatprep.subr.mxu0 %v212
        %1099 = vmatpush1.msra.mxu0 %v211
        %1100 = vmatprep.subr.mxu0 %v708
        %1101 = vmatpush2.msra.mxu0 %v707
        %1102 = vmatprep.subr.mxu0 %v692
        %1103 = vmatpush2.msra.mxu0 %v691
        %1104 = vmatprep.subr.mxu0 %v676
        %1105 = vmatpush2.msra.mxu0 %v675
        %1106 = vmatprep.subr.mxu0 %v660
        %1107 = vmatpush2.msra.mxu0 %v659
        %1108 = vmatprep.subr.mxu0 %v644
        %1109 = vmatpush2.msra.mxu0 %v643
        %1110 = vmatprep.subr.mxu0 %v628
        %1111 = vmatpush2.msra.mxu0 %v627
        %1112 = vmatprep.subr.mxu0 %v612
        %1113 = vmatpush2.msra.mxu0 %v611
        %1114 = vmatprep.subr.mxu0 %v596
        %1115 = vmatpush2.msra.mxu0 %v595
        %1116 = vmatprep.subr.mxu0 %v580
        %1117 = vmatpush2.msra.mxu0 %v579
        %1118 = vmatprep.subr.mxu0 %v564
        %1119 = vmatpush2.msra.mxu0 %v563
        %1120 = vmatprep.subr.mxu0 %v548
        %1121 = vmatpush2.msra.mxu0 %v547
        %1122 = vmatprep.subr.mxu0 %v532
        %1123 = vmatpush2.msra.mxu0 %v531
        %1124 = vmatprep.subr.mxu0 %v516
        %1125 = vmatpush2.msra.mxu0 %v515
        %1126 = vmatprep.subr.mxu0 %v500
        %1127 = vmatpush2.msra.mxu0 %v499
        %1128 = vmatprep.subr.mxu0 %v484
        %1129 = vmatpush2.msra.mxu0 %v483
        %1130 = vmatprep.subr.mxu0 %v468
        %1131 = vmatpush2.msra.mxu0 %v467
        %1132 = vmatprep.mubr.f32.mxu0 %v200
        %1133 = vmatmul.mubr.f32.gmra.mxu0 %v199
        %v1134 = vpop.f32.mrf.mxu0
        %v1135 = vadd.f32 0.0, %v1134
        %v1136 = vpop.f32.mrf.mxu0
        %v1137 = vadd.f32 0.0, %v1136
        %1138 = vdwg.mxu0
        %1139 = vmatprep.subr.mxu0 %v454
        %1140 = vmatpush1.msra.mxu0 %v453
        %1141 = vmatprep.subr.mxu0 %v438
        %1142 = vmatpush1.msra.mxu0 %v437
        %1143 = vmatprep.subr.mxu0 %v422
        %1144 = vmatpush1.msra.mxu0 %v421
        %1145 = vmatprep.subr.mxu0 %v406
        %1146 = vmatpush1.msra.mxu0 %v405
        %1147 = vmatprep.subr.mxu0 %v390
        %1148 = vmatpush1.msra.mxu0 %v389
        %1149 = vmatprep.subr.mxu0 %v374
        %1150 = vmatpush1.msra.mxu0 %v373
        %1151 = vmatprep.subr.mxu0 %v358
        %1152 = vmatpush1.msra.mxu0 %v357
        %1153 = vmatprep.subr.mxu0 %v342
        %1154 = vmatpush1.msra.mxu0 %v341
        %1155 = vmatprep.subr.mxu0 %v326
        %1156 = vmatpush1.msra.mxu0 %v325
        %1157 = vmatprep.subr.mxu0 %v310
        %1158 = vmatpush1.msra.mxu0 %v309
        %1159 = vmatprep.subr.mxu0 %v294
        %1160 = vmatpush1.msra.mxu0 %v293
        %1161 = vmatprep.subr.mxu0 %v278
        %1162 = vmatpush1.msra.mxu0 %v277
        %1163 = vmatprep.subr.mxu0 %v262
        %1164 = vmatpush1.msra.mxu0 %v261
        %1165 = vmatprep.subr.mxu0 %v246
        %1166 = vmatpush1.msra.mxu0 %v245
        %1167 = vmatprep.subr.mxu0 %v230
        %1168 = vmatpush1.msra.mxu0 %v229
        %1169 = vmatprep.subr.mxu0 %v214
        %1170 = vmatpush1.msra.mxu0 %v213
        %1171 = vmatprep.subr.mxu0 %v710
        %1172 = vmatpush2.msra.mxu0 %v709
        %1173 = vmatprep.subr.mxu0 %v694
        %1174 = vmatpush2.msra.mxu0 %v693
        %1175 = vmatprep.subr.mxu0 %v678
        %1176 = vmatpush2.msra.mxu0 %v677
        %1177 = vmatprep.subr.mxu0 %v662
        %1178 = vmatpush2.msra.mxu0 %v661
        %1179 = vmatprep.subr.mxu0 %v646
        %1180 = vmatpush2.msra.mxu0 %v645
        %1181 = vmatprep.subr.mxu0 %v630
        %1182 = vmatpush2.msra.mxu0 %v629
        %1183 = vmatprep.subr.mxu0 %v614
        %1184 = vmatpush2.msra.mxu0 %v613
        %1185 = vmatprep.subr.mxu0 %v598
        %1186 = vmatpush2.msra.mxu0 %v597
        %1187 = vmatprep.subr.mxu0 %v582
        %1188 = vmatpush2.msra.mxu0 %v581
        %1189 = vmatprep.subr.mxu0 %v566
        %1190 = vmatpush2.msra.mxu0 %v565
        %1191 = vmatprep.subr.mxu0 %v550
        %1192 = vmatpush2.msra.mxu0 %v549
        %1193 = vmatprep.subr.mxu0 %v534
        %1194 = vmatpush2.msra.mxu0 %v533
        %1195 = vmatprep.subr.mxu0 %v518
        %1196 = vmatpush2.msra.mxu0 %v517
        %1197 = vmatprep.subr.mxu0 %v502
        %1198 = vmatpush2.msra.mxu0 %v501
        %1199 = vmatprep.subr.mxu0 %v486
        %1200 = vmatpush2.msra.mxu0 %v485
        %1201 = vmatprep.subr.mxu0 %v470
        %1202 = vmatpush2.msra.mxu0 %v469
        %1203 = vmatprep.mubr.f32.mxu0 %v200
        %1204 = vmatmul.mubr.f32.gmra.mxu0 %v199
        %v1205 = vpop.f32.mrf.mxu0
        %v1206 = vadd.f32 0.0, %v1205
        %v1207 = vpop.f32.mrf.mxu0
        %v1208 = vadd.f32 0.0, %v1207
        %1209 = vdwg.mxu0
        %1210 = vmatprep.subr.mxu0 %v456
        %1211 = vmatpush1.msra.mxu0 %v455
        %1212 = vmatprep.subr.mxu0 %v440
        %1213 = vmatpush1.msra.mxu0 %v439
        %1214 = vmatprep.subr.mxu0 %v424
        %1215 = vmatpush1.msra.mxu0 %v423
        %1216 = vmatprep.subr.mxu0 %v408
        %1217 = vmatpush1.msra.mxu0 %v407
        %1218 = vmatprep.subr.mxu0 %v392
        %1219 = vmatpush1.msra.mxu0 %v391
        %1220 = vmatprep.subr.mxu0 %v376
        %1221 = vmatpush1.msra.mxu0 %v375
        %1222 = vmatprep.subr.mxu0 %v360
        %1223 = vmatpush1.msra.mxu0 %v359
        %1224 = vmatprep.subr.mxu0 %v344
        %1225 = vmatpush1.msra.mxu0 %v343
        %1226 = vmatprep.subr.mxu0 %v328
        %1227 = vmatpush1.msra.mxu0 %v327
        %1228 = vmatprep.subr.mxu0 %v312
        %1229 = vmatpush1.msra.mxu0 %v311
        %1230 = vmatprep.subr.mxu0 %v296
        %1231 = vmatpush1.msra.mxu0 %v295
        %1232 = vmatprep.subr.mxu0 %v280
        %1233 = vmatpush1.msra.mxu0 %v279
        %1234 = vmatprep.subr.mxu0 %v264
        %1235 = vmatpush1.msra.mxu0 %v263
        %1236 = vmatprep.subr.mxu0 %v248
        %1237 = vmatpush1.msra.mxu0 %v247
        %1238 = vmatprep.subr.mxu0 %v232
        %1239 = vmatpush1.msra.mxu0 %v231
        %1240 = vmatprep.subr.mxu0 %v216
        %1241 = vmatpush1.msra.mxu0 %v215
        %1242 = vmatprep.subr.mxu0 %v712
        %1243 = vmatpush2.msra.mxu0 %v711
        %1244 = vmatprep.subr.mxu0 %v696
        %1245 = vmatpush2.msra.mxu0 %v695
        %1246 = vmatprep.subr.mxu0 %v680
        %1247 = vmatpush2.msra.mxu0 %v679
        %1248 = vmatprep.subr.mxu0 %v664
        %1249 = vmatpush2.msra.mxu0 %v663
        %1250 = vmatprep.subr.mxu0 %v648
        %1251 = vmatpush2.msra.mxu0 %v647
        %1252 = vmatprep.subr.mxu0 %v632
        %1253 = vmatpush2.msra.mxu0 %v631
        %1254 = vmatprep.subr.mxu0 %v616
        %1255 = vmatpush2.msra.mxu0 %v615
        %1256 = vmatprep.subr.mxu0 %v600
        %1257 = vmatpush2.msra.mxu0 %v599
        %1258 = vmatprep.subr.mxu0 %v584
        %1259 = vmatpush2.msra.mxu0 %v583
        %1260 = vmatprep.subr.mxu0 %v568
        %1261 = vmatpush2.msra.mxu0 %v567
        %1262 = vmatprep.subr.mxu0 %v552
        %1263 = vmatpush2.msra.mxu0 %v551
        %1264 = vmatprep.subr.mxu0 %v536
        %1265 = vmatpush2.msra.mxu0 %v535
        %1266 = vmatprep.subr.mxu0 %v520
        %1267 = vmatpush2.msra.mxu0 %v519
        %1268 = vmatprep.subr.mxu0 %v504
        %1269 = vmatpush2.msra.mxu0 %v503
        %1270 = vmatprep.subr.mxu0 %v488
        %1271 = vmatpush2.msra.mxu0 %v487
        %1272 = vmatprep.subr.mxu0 %v472
        %1273 = vmatpush2.msra.mxu0 %v471
        %1274 = vmatprep.mubr.f32.mxu0 %v200
        %1275 = vmatmul.mubr.f32.gmra.mxu0 %v199
        %v1276 = vpop.f32.mrf.mxu0
        %v1277 = vadd.f32 0.0, %v1276
        %v1278 = vpop.f32.mrf.mxu0
        %v1279 = vadd.f32 0.0, %v1278
        %1280 = vdwg.mxu0
        %1281 = vst [vmem:[%s196] sm:$0xff] %v780
        %1282 = vst [vmem:[%s196 + $0x8] sm:$0xff] %v782
        %1283 = vst [vmem:[%s196 + $0x10] sm:$0xff] %v851
        %1284 = vst [vmem:[%s196 + $0x18] sm:$0xff] %v853
        %1285 = vst [vmem:[%s196 + $0x20] sm:$0xff] %v922
        %1286 = vst [vmem:[%s196 + $0x28] sm:$0xff] %v924
        %1287 = vst [vmem:[%s196 + $0x30] sm:$0xff] %v993
        %1288 = vst [vmem:[%s196 + $0x38] sm:$0xff] %v995
        %1289 = vst [vmem:[%s196 + $0x40] sm:$0xff] %v1064
        %1290 = vst [vmem:[%s196 + $0x48] sm:$0xff] %v1066
        %1291 = vst [vmem:[%s196 + $0x50] sm:$0xff] %v1135
        %1292 = vst [vmem:[%s196 + $0x58] sm:$0xff] %v1137
        %1293 = vst [vmem:[%s196 + $0x60] sm:$0xff] %v1206
        %1294 = vst [vmem:[%s196 + $0x68] sm:$0xff] %v1208
        %1295 = vst [vmem:[%s196 + $0x70] sm:$0xff] %v1277
        %1296 = vst [vmem:[%s196 + $0x78] sm:$0xff] %v1279
        %s1297 = sand.u32 %s94, 1
        %s1298 = scalar_lea.sflag [#allocation4], %s1297
        %s1299 = sand.u32 %s94, 1
        %s1300 = smul.addr %s1299, 128
        %s1301 = scalar_lea.vmem [#allocation7], %s1300
        // Predicated region
        $region37: #{tpu_custom_call.1} parent=27 // pred_check
          %p1302 = pneg %p104
        $region38: #{tpu_custom_call.1} parent=27 // pred_check_branch
          %1304 = sbr.rel (%p1302) target = $region40
        $region39: #{tpu_custom_call.1} parent=27 // pred_region
          %s1305 = smul.u32 16, %s25
          %s1307 = ssub.s32 2048, 2048
          %1308 = vsyncadd %s1298, %s1307
          %s1309 = smul.addr %s24, 32
          %s1310 = sadd.s32 %s1305, %s1309
          %s1311 = smul.addr %s1310, 128
          %s1312 = scalar_lea.hbm %s2, %s1311
          %s1314 = sshll.u32 %s1301, 4
          %s1315 = int_to_ptr.vmem [resolvable:$true] %s1314
          %1317 = dma.vmem_to_hbm [thread:$0]  %s1315, 2048, %s1312, %s1298
        $region40: #{tpu_custom_call.1} parent=27 // pred_fallthru
          _
      $region28: #{tpu_custom_call.1} parent=5 // pred_fallthru
        _
      %p1318 = scmp.le.s32.totalorder 2, %s15
      // Predicated region
      $region41: #{tpu_custom_call.1} parent=5 // pred_check
        %p1319 = pneg %p1318
      $region42: #{tpu_custom_call.1} parent=5 // pred_check_branch
        %1321 = sbr.rel (%p1319) target = $region44
      $region43: #{tpu_custom_call.1} parent=5 // pred_region
        %s1322 = ssub.s32 %s15, 2
        // Predicated region
        $region45: #{tpu_custom_call.1} parent=43 // pred_check
          %p1323 = pneg %p110
        $region46: #{tpu_custom_call.1} parent=43 // pred_check_branch
          %1325 = sbr.rel (%p1323) target = $region48
        $region47: #{tpu_custom_call.1} parent=43 // pred_region
          %s1326 = sand.u32 %s95, 1
          %s1327 = scalar_lea.sflag [#allocation4], %s1326
          %s1328 = sand.u32 %s95, 1
          %s1329 = smul.addr %s1328, 128
          %s1330 = scalar_lea.vmem [#allocation7], %s1329
          %1331 = dma.done %s1327, 2048
        $region48: #{tpu_custom_call.1} parent=43 // pred_fallthru
          _
      $region44: #{tpu_custom_call.1} parent=5 // pred_fallthru
        _
    $region6: #{tpu_custom_call.1} parent=1 // loop_footer
      %s19 = sadd.s32 1, %s15
    $region7: #{tpu_custom_call.1} parent=1 // loop_footer_branch
      %14 = sbr.rel target = $region3
    $region8: #{tpu_custom_call.1} parent=1 // loop_exit
      _
    %1332 = vsyncpa [#allocation3], 1
    %s1333 = scalar_lea.sflag [#allocation3], 1
    %1334 = vsyncpa %s1333, 1
    %1335 = vsyncpa [#allocation6], 1
    %1336 = vsyncpa [#allocation4], 1
    %s1337 = scalar_lea.sflag [#allocation4], 1
    %1338 = vsyncpa %s1337, 1

</llo_original>
